<compile_context>
chip_gen: v6e
topology: v6e:2x2x1
jax: 0.10.0
libtpu: 0.0.40
codegen_flags: <defaults>
</compile_context>

<pallas_src>
import jax
import jax.numpy as jnp
from jax import lax
from jax.experimental import pallas as pl
from jax.experimental.pallas import tpu as pltpu

K = 7
PAD = 3


def _make_kernel(C, H, W, LB):
    Hp = H + 2 * PAD
    Wp = W + 2 * PAD
    inv_c = 1.0 / C

    def kernel(w_ref, b_ref, x_ref, o_ref, pad_ref):
        # w_ref:   SMEM (2*K*K,) conv weight flattened in [in_ch, kh, kw] order
        # b_ref:   SMEM (1,) conv bias
        # x_ref:   VMEM (C, H, W, LB)  -- LB batch elements in the lane dim
        # o_ref:   VMEM (C, H, W, LB)
        # pad_ref: VMEM scratch (2, Hp, Wp, LB): zero-padded [mean, max] maps

        # ---- Phase 0: zero only the halo strips; the interior is fully
        # overwritten in Phase 1.  Scratch persists across grid steps (and the
        # grid may be split across TensorCores), so re-establish it each step.
        pad_ref[:, :PAD, :, :] = jnp.zeros((2, PAD, Wp, LB), jnp.float32)
        pad_ref[:, PAD + H:, :, :] = jnp.zeros((2, PAD, Wp, LB), jnp.float32)
        pad_ref[:, PAD:PAD + H, :PAD, :] = jnp.zeros((2, H, PAD, LB), jnp.float32)
        pad_ref[:, PAD:PAD + H, PAD + W:, :] = jnp.zeros((2, H, PAD, LB), jnp.float32)

        # ---- Phase 1: per-row channel mean / max into the padded interior.
        # Live state per iteration is a few (W, LB) slabs (~6 vregs), never the
        # full (C, H, W, LB) block.
        @pl.loop(0, H)
        def _stats_row(h):
            x0 = x_ref[0, h].astype(jnp.float32)           # (W, LB)
            s = x0
            m = x0
            for c in range(1, C):                          # static unroll, tiny live set
                xc = x_ref[c, h].astype(jnp.float32)
                s = s + xc
                m = jnp.maximum(m, xc)
            pad_ref[0, PAD + h, PAD:PAD + W, :] = s * inv_c
            pad_ref[1, PAD + h, PAD:PAD + W, :] = m

        # Hoisted broadcast (JAX does not CSE broadcast_in_dim inside loops).
        bias_vec = jnp.full((W, LB), b_ref[0], dtype=jnp.float32)

        # ---- Phase 2: per-row 7x7 conv (scalar(SMEM) x vector MACs on the
        # VPU), sigmoid, then per-channel multiply + store.  The accumulator is
        # (W, LB) (~2 vregs f32 at W=16), so the 98 unrolled taps never spill.
        # Each padded row is loaded once per (ci, kh); the 7 kw taps are static
        # slices of the in-register row (no lane movement — batch stays put).
        @pl.loop(0, H)
        def _conv_row(h):
            acc = bias_vec
            for ci in range(2):
                for kh in range(K):
                    row = pad_ref[ci, h + kh]              # (Wp, LB), one load per (ci, kh)
                    for kw in range(K):
                        wv = w_ref[ci * K * K + kh * K + kw]
                        acc = acc + wv * row[kw:kw + W, :]
            attn = jax.nn.sigmoid(acc)                     # (W, LB)
            for c in range(C):                             # interleave output stores w/ compute
                xc = x_ref[c, h].astype(jnp.float32)
                o_ref[c, h] = (xc * attn).astype(o_ref.dtype)

    return kernel


def _lane_block_for_batch(B):
    # Larger lane blocks amortize the ~0.35 us per-grid-step pipeline overhead.
    if B >= 256:
        return 256
    if B >= 128:
        return 128
    # Small batch: do NOT pad to 128 lanes — the block's last dim equals the
    # full array dim (allowed by Mosaic), avoiding 64x redundant compute and a
    # padded-array HBM round trip in the wrapper.
    return B


@jax.jit
def spatial_attention(x, weight, bias):
    """x: (B, C, H, W); weight: (1, 2, 7, 7); bias: (1,)."""
    B, C, H, W = x.shape
    LB = _lane_block_for_batch(B)
    B_pad = ((B + LB - 1) // LB) * LB

    # Layout plumbing: batch into the lane dim.  In a real network the
    # (C, H, W, B) lane-major layout would be kept across layers so the
    # transpose is paid once, not per call.
    x_p = x if B_pad == B else jnp.pad(x, ((0, B_pad - B), (0, 0), (0, 0), (0, 0)))
    xt = jnp.transpose(x_p, (1, 2, 3, 0))                  # (C, H, W, B_pad)

    w_flat = weight.reshape(-1).astype(jnp.float32)        # (98,) [in_ch, kh, kw]
    b = bias.reshape(-1).astype(jnp.float32)               # (1,)

    # VMEM budget: in + out blocks (double-buffered) + padded-stats scratch.
    # Keep well under the 32 MiB scoped default and v7x's 64 MiB physical VMEM.
    Hp, Wp = H + 2 * PAD, W + 2 * PAD
    itemsize = jnp.dtype(x.dtype).itemsize
    vmem_bytes = 2 * 2 * (C * H * W * LB * itemsize) + 2 * Hp * Wp * LB * 4
    assert vmem_bytes < 24 * 1024 * 1024, (
        f"per-step VMEM ~{vmem_bytes / 2**20:.1f} MiB is too large; "
        "reduce the lane block or add channel tiling")
    # TODO(synk): for very large C (e.g. C=256 CBAM stages) add a C-tiling grid
    # axis (accumulate sum / running-max over C-tiles, marked "arbitrary")
    # instead of loading the full (C, H, W, LB) block per step.

    out_t = pl.pallas_call(
        _make_kernel(C, H, W, LB),
        out_shape=jax.ShapeDtypeStruct(xt.shape, x.dtype),
        grid_spec=pltpu.PrefetchScalarGridSpec(
            num_scalar_prefetch=0,
            grid=(B_pad // LB,),
            in_specs=[
                pl.BlockSpec(memory_space=pltpu.MemorySpace.SMEM),   # weight
                pl.BlockSpec(memory_space=pltpu.MemorySpace.SMEM),   # bias
                pl.BlockSpec((C, H, W, LB), lambda bb: (0, 0, 0, bb)),
            ],
            out_specs=pl.BlockSpec((C, H, W, LB), lambda bb: (0, 0, 0, bb)),
            scratch_shapes=[
                pltpu.VMEM((2, Hp, Wp, LB), jnp.float32),
            ],
        ),
        # Batch blocks split across TensorCores on v7x when the grid has >= 2
        # steps; small-batch calls (grid length 1) run on a single TC.
        compiler_params=pltpu.CompilerParams(
            dimension_semantics=("parallel",),
        ),
    )(w_flat, b, xt)

    out = jnp.transpose(out_t, (3, 0, 1, 2))               # (B_pad, C, H, W)
    return out[:B] if B_pad != B else out


def spatial_attention_ref(x, weight, bias):
    """Pure-JAX reference matching the PyTorch forward."""
    mean_c = jnp.mean(x, axis=1, keepdims=True)
    max_c = jnp.max(x, axis=1, keepdims=True)
    feat = jnp.concatenate([mean_c, max_c], axis=1)        # (B, 2, H, W)
    conv = lax.conv_general_dilated(
        feat, weight, window_strides=(1, 1),
        padding=((PAD, PAD), (PAD, PAD)),
        dimension_numbers=("NCHW", "OIHW", "NCHW"),
    ) + bias.reshape(1, 1, 1, 1)
    return x * jax.nn.sigmoid(conv)


if __name__ == "__main__":
    key = jax.random.PRNGKey(0)
    kx, kw, kb = jax.random.split(key, 3)

    B, C, H, W = 2, 4, 16, 16
    x = jax.random.normal(kx, (B, C, H, W), dtype=jnp.float32)

    # Conv2d(2, 1, 7, padding=3), kaiming_normal_(fan_out, relu): std = sqrt(2/49)
    std = (2.0 / (1 * K * K)) ** 0.5
    weight = jax.random.normal(kw, (1, 2, K, K), dtype=jnp.float32) * std
    # PyTorch default conv bias init: U(-1/sqrt(fan_in), 1/sqrt(fan_in)), fan_in = 2*49
    bound = 1.0 / (2 * K * K) ** 0.5
    bias = jax.random.uniform(kb, (1,), minval=-bound, maxval=bound, dtype=jnp.float32)

    out = spatial_attention(x, weight, bias)
    out = jax.block_until_ready(out)

    ref = spatial_attention_ref(x, weight, bias)
    assert out.shape == (B, C, H, W)
    assert jnp.allclose(out, ref, atol=1e-4, rtol=1e-4)

    print("KERNEL_OK")
</pallas_src>

<mosaic_0001>
module attributes {stable_mosaic.version = 11 : i64} {
  func.func @kernel(%arg0: i32, %arg1: memref<98xf32, #tpu.memory_space<smem>>, %arg2: memref<1xf32, #tpu.memory_space<smem>>, %arg3: memref<4x16x16x2xf32, #tpu.memory_space<vmem>>, %arg4: memref<4x16x16x2xf32, #tpu.memory_space<vmem>>, %arg5: memref<2x22x22x2xf32, #tpu.memory_space<vmem>>) attributes {dimension_semantics = [#tpu.dimension_semantics<parallel>], iteration_bounds = array<i64: 1>, scalar_prefetch = 0 : i64, scratch_operands = 1 : i64, tpu.core_type = #tpu.core_type<tc>, window_params = [{transform_indices = @transform_0, window_bounds = array<i64: 98>}, {transform_indices = @transform_1, window_bounds = array<i64: 1>}, {transform_indices = @transform_2, window_bounds = array<i64: 4, 16, 16, 2>}, {transform_indices = @transform_3, window_bounds = array<i64: 4, 16, 16, 2>}]} {
    %cst = arith.constant 0.000000e+00 : f32
    %0 = vector.broadcast %cst : f32 to vector<2x3x22x2xf32>
    %c0 = arith.constant 0 : index
    %c0_0 = arith.constant 0 : index
    %c0_1 = arith.constant 0 : index
    %c0_2 = arith.constant 0 : index
    %1 = vector.load %arg5[%c0, %c0_0, %c0_1, %c0_2] : memref<2x22x22x2xf32, #tpu.memory_space<vmem>>, vector<2x3x22x2xf32>
    tpu.vector_store %arg5[%c0, %c0_0, %c0_1, %c0_2], %0 {strides = array<i32>} : memref<2x22x22x2xf32, #tpu.memory_space<vmem>>, vector<2x3x22x2xf32>,
    %cst_3 = arith.constant 0.000000e+00 : f32
    %2 = vector.broadcast %cst_3 : f32 to vector<2x3x22x2xf32>
    %c0_4 = arith.constant 0 : index
    %c19 = arith.constant 19 : index
    %c0_5 = arith.constant 0 : index
    %c0_6 = arith.constant 0 : index
    %3 = vector.load %arg5[%c0_4, %c19, %c0_5, %c0_6] : memref<2x22x22x2xf32, #tpu.memory_space<vmem>>, vector<2x3x22x2xf32>
    tpu.vector_store %arg5[%c0_4, %c19, %c0_5, %c0_6], %2 {strides = array<i32>} : memref<2x22x22x2xf32, #tpu.memory_space<vmem>>, vector<2x3x22x2xf32>,
    %cst_7 = arith.constant 0.000000e+00 : f32
    %4 = vector.broadcast %cst_7 : f32 to vector<2x16x3x2xf32>
    %c0_8 = arith.constant 0 : index
    %c3 = arith.constant 3 : index
    %c0_9 = arith.constant 0 : index
    %c0_10 = arith.constant 0 : index
    %5 = vector.load %arg5[%c0_8, %c3, %c0_9, %c0_10] : memref<2x22x22x2xf32, #tpu.memory_space<vmem>>, vector<2x16x3x2xf32>
    tpu.vector_store %arg5[%c0_8, %c3, %c0_9, %c0_10], %4 {strides = array<i32>} : memref<2x22x22x2xf32, #tpu.memory_space<vmem>>, vector<2x16x3x2xf32>,
    %cst_11 = arith.constant 0.000000e+00 : f32
    %6 = vector.broadcast %cst_11 : f32 to vector<2x16x3x2xf32>
    %c0_12 = arith.constant 0 : index
    %c3_13 = arith.constant 3 : index
    %c19_14 = arith.constant 19 : index
    %c0_15 = arith.constant 0 : index
    %7 = vector.load %arg5[%c0_12, %c3_13, %c19_14, %c0_15] : memref<2x22x22x2xf32, #tpu.memory_space<vmem>>, vector<2x16x3x2xf32>
    tpu.vector_store %arg5[%c0_12, %c3_13, %c19_14, %c0_15], %6 {strides = array<i32>} : memref<2x22x22x2xf32, #tpu.memory_space<vmem>>, vector<2x16x3x2xf32>,
    %c0_i32 = arith.constant 0 : i32
    %c16_i32 = arith.constant 16 : i32
    %8 = arith.addi %c0_i32, %c16_i32 : i32
    %c1_i32 = arith.constant 1 : i32
    scf.for %arg6 = %c0_i32 to %8 step %c1_i32  : i32 {
      %c1_i32_22 = arith.constant 1 : i32
      %12 = arith.muli %arg6, %c1_i32_22 : i32
      %c0_i32_23 = arith.constant 0 : i32
      %13 = arith.addi %c0_i32_23, %12 : i32
      %c0_24 = arith.constant 0 : index
      %14 = arith.index_cast %13 : i32 to index
      %c0_25 = arith.constant 0 : index
      %c0_26 = arith.constant 0 : index
      %15 = vector.load %arg3[%c0_24, %14, %c0_25, %c0_26] : memref<4x16x16x2xf32, #tpu.memory_space<vmem>>, vector<1x1x16x2xf32>
      %16 = vector.shape_cast %15 : vector<1x1x16x2xf32> to vector<16x2xf32>
      %c1 = arith.constant 1 : index
      %17 = arith.index_cast %13 : i32 to index
      %c0_27 = arith.constant 0 : index
      %c0_28 = arith.constant 0 : index
      %18 = vector.load %arg3[%c1, %17, %c0_27, %c0_28] : memref<4x16x16x2xf32, #tpu.memory_space<vmem>>, vector<1x1x16x2xf32>
      %19 = vector.shape_cast %18 : vector<1x1x16x2xf32> to vector<16x2xf32>
      %20 = arith.addf %16, %19 : vector<16x2xf32>
      %21 = arith.maximumf %16, %19 : vector<16x2xf32>
      %c2 = arith.constant 2 : index
      %22 = arith.index_cast %13 : i32 to index
      %c0_29 = arith.constant 0 : index
      %c0_30 = arith.constant 0 : index
      %23 = vector.load %arg3[%c2, %22, %c0_29, %c0_30] : memref<4x16x16x2xf32, #tpu.memory_space<vmem>>, vector<1x1x16x2xf32>
      %24 = vector.shape_cast %23 : vector<1x1x16x2xf32> to vector<16x2xf32>
      %25 = arith.addf %20, %24 : vector<16x2xf32>
      %26 = arith.maximumf %21, %24 : vector<16x2xf32>
      %c3_31 = arith.constant 3 : index
      %27 = arith.index_cast %13 : i32 to index
      %c0_32 = arith.constant 0 : index
      %c0_33 = arith.constant 0 : index
      %28 = vector.load %arg3[%c3_31, %27, %c0_32, %c0_33] : memref<4x16x16x2xf32, #tpu.memory_space<vmem>>, vector<1x1x16x2xf32>
      %29 = vector.shape_cast %28 : vector<1x1x16x2xf32> to vector<16x2xf32>
      %30 = arith.addf %25, %29 : vector<16x2xf32>
      %31 = arith.maximumf %26, %29 : vector<16x2xf32>
      %cst_34 = arith.constant 2.500000e-01 : f32
      %32 = vector.broadcast %cst_34 : f32 to vector<16x2xf32>
      %33 = arith.mulf %30, %32 : vector<16x2xf32>
      %c3_i32 = arith.constant 3 : i32
      %34 = arith.addi %c3_i32, %13 : i32
      %c0_35 = arith.constant 0 : index
      %35 = arith.index_cast %34 : i32 to index
      %c3_36 = arith.constant 3 : index
      %c0_37 = arith.constant 0 : index
      %36 = vector.load %arg5[%c0_35, %35, %c3_36, %c0_37] : memref<2x22x22x2xf32, #tpu.memory_space<vmem>>, vector<1x1x16x2xf32>
      %37 = vector.shape_cast %36 : vector<1x1x16x2xf32> to vector<16x2xf32>
      %38 = vector.shape_cast %33 : vector<16x2xf32> to vector<1x1x16x2xf32>
      tpu.vector_store %arg5[%c0_35, %35, %c3_36, %c0_37], %38 {strides = array<i32>} : memref<2x22x22x2xf32, #tpu.memory_space<vmem>>, vector<1x1x16x2xf32>,
      %c3_i32_38 = arith.constant 3 : i32
      %39 = arith.addi %c3_i32_38, %13 : i32
      %c1_39 = arith.constant 1 : index
      %40 = arith.index_cast %39 : i32 to index
      %c3_40 = arith.constant 3 : index
      %c0_41 = arith.constant 0 : index
      %41 = vector.load %arg5[%c1_39, %40, %c3_40, %c0_41] : memref<2x22x22x2xf32, #tpu.memory_space<vmem>>, vector<1x1x16x2xf32>
      %42 = vector.shape_cast %41 : vector<1x1x16x2xf32> to vector<16x2xf32>
      %43 = vector.shape_cast %31 : vector<16x2xf32> to vector<1x1x16x2xf32>
      tpu.vector_store %arg5[%c1_39, %40, %c3_40, %c0_41], %43 {strides = array<i32>} : memref<2x22x22x2xf32, #tpu.memory_space<vmem>>, vector<1x1x16x2xf32>,
    }
    %c16_i32_16 = arith.constant 16 : i32
    %c0_17 = arith.constant 0 : index
    %9 = memref.load %arg2[%c0_17] : memref<1xf32, #tpu.memory_space<smem>>
    %10 = vector.broadcast %9 : f32 to vector<16x2xf32>
    %c0_i32_18 = arith.constant 0 : i32
    %c16_i32_19 = arith.constant 16 : i32
    %11 = arith.addi %c0_i32_18, %c16_i32_19 : i32
    %c1_i32_20 = arith.constant 1 : i32
    scf.for %arg6 = %c0_i32_18 to %11 step %c1_i32_20  : i32 {
      %c1_i32_22 = arith.constant 1 : i32
      %12 = arith.muli %arg6, %c1_i32_22 : i32
      %c0_i32_23 = arith.constant 0 : i32
      %13 = arith.addi %c0_i32_23, %12 : i32
      %c0_i32_24 = arith.constant 0 : i32
      %14 = arith.addi %13, %c0_i32_24 : i32
      %c0_25 = arith.constant 0 : index
      %15 = arith.index_cast %14 : i32 to index
      %c0_26 = arith.constant 0 : index
      %c0_27 = arith.constant 0 : index
      %16 = vector.load %arg5[%c0_25, %15, %c0_26, %c0_27] : memref<2x22x22x2xf32, #tpu.memory_space<vmem>>, vector<1x1x22x2xf32>
      %17 = vector.shape_cast %16 : vector<1x1x22x2xf32> to vector<22x2xf32>
      %c0_28 = arith.constant 0 : index
      %18 = memref.load %arg1[%c0_28] : memref<98xf32, #tpu.memory_space<smem>>
      %19 = vector.extract_strided_slice %17 {offsets = [0, 0], sizes = [16, 2], strides = [1, 1]} : vector<22x2xf32> to vector<16x2xf32>
      %20 = vector.broadcast %18 : f32 to vector<16x2xf32>
      %21 = arith.mulf %20, %19 : vector<16x2xf32>
      %22 = arith.addf %10, %21 : vector<16x2xf32>
      %c1 = arith.constant 1 : index
      %23 = memref.load %arg1[%c1] : memref<98xf32, #tpu.memory_space<smem>>
      %24 = vector.extract_strided_slice %17 {offsets = [1, 0], sizes = [16, 2], strides = [1, 1]} : vector<22x2xf32> to vector<16x2xf32>
      %25 = vector.broadcast %23 : f32 to vector<16x2xf32>
      %26 = arith.mulf %25, %24 : vector<16x2xf32>
      %27 = arith.addf %22, %26 : vector<16x2xf32>
      %c2 = arith.constant 2 : index
      %28 = memref.load %arg1[%c2] : memref<98xf32, #tpu.memory_space<smem>>
      %29 = vector.extract_strided_slice %17 {offsets = [2, 0], sizes = [16, 2], strides = [1, 1]} : vector<22x2xf32> to vector<16x2xf32>
      %30 = vector.broadcast %28 : f32 to vector<16x2xf32>
      %31 = arith.mulf %30, %29 : vector<16x2xf32>
      %32 = arith.addf %27, %31 : vector<16x2xf32>
      %c3_29 = arith.constant 3 : index
      %33 = memref.load %arg1[%c3_29] : memref<98xf32, #tpu.memory_space<smem>>
      %34 = vector.extract_strided_slice %17 {offsets = [3, 0], sizes = [16, 2], strides = [1, 1]} : vector<22x2xf32> to vector<16x2xf32>
      %35 = vector.broadcast %33 : f32 to vector<16x2xf32>
      %36 = arith.mulf %35, %34 : vector<16x2xf32>
      %37 = arith.addf %32, %36 : vector<16x2xf32>
      %c4 = arith.constant 4 : index
      %38 = memref.load %arg1[%c4] : memref<98xf32, #tpu.memory_space<smem>>
      %39 = vector.extract_strided_slice %17 {offsets = [4, 0], sizes = [16, 2], strides = [1, 1]} : vector<22x2xf32> to vector<16x2xf32>
      %40 = vector.broadcast %38 : f32 to vector<16x2xf32>
      %41 = arith.mulf %40, %39 : vector<16x2xf32>
      %42 = arith.addf %37, %41 : vector<16x2xf32>
      %c5 = arith.constant 5 : index
      %43 = memref.load %arg1[%c5] : memref<98xf32, #tpu.memory_space<smem>>
      %44 = vector.extract_strided_slice %17 {offsets = [5, 0], sizes = [16, 2], strides = [1, 1]} : vector<22x2xf32> to vector<16x2xf32>
      %45 = vector.broadcast %43 : f32 to vector<16x2xf32>
      %46 = arith.mulf %45, %44 : vector<16x2xf32>
      %47 = arith.addf %42, %46 : vector<16x2xf32>
      %c6 = arith.constant 6 : index
      %48 = memref.load %arg1[%c6] : memref<98xf32, #tpu.memory_space<smem>>
      %49 = vector.extract_strided_slice %17 {offsets = [6, 0], sizes = [16, 2], strides = [1, 1]} : vector<22x2xf32> to vector<16x2xf32>
      %50 = vector.broadcast %48 : f32 to vector<16x2xf32>
      %51 = arith.mulf %50, %49 : vector<16x2xf32>
      %52 = arith.addf %47, %51 : vector<16x2xf32>
      %c1_i32_30 = arith.constant 1 : i32
      %53 = arith.addi %13, %c1_i32_30 : i32
      %c0_31 = arith.constant 0 : index
      %54 = arith.index_cast %53 : i32 to index
      %c0_32 = arith.constant 0 : index
      %c0_33 = arith.constant 0 : index
      %55 = vector.load %arg5[%c0_31, %54, %c0_32, %c0_33] : memref<2x22x22x2xf32, #tpu.memory_space<vmem>>, vector<1x1x22x2xf32>
      %56 = vector.shape_cast %55 : vector<1x1x22x2xf32> to vector<22x2xf32>
      %c7 = arith.constant 7 : index
      %57 = memref.load %arg1[%c7] : memref<98xf32, #tpu.memory_space<smem>>
      %58 = vector.extract_strided_slice %56 {offsets = [0, 0], sizes = [16, 2], strides = [1, 1]} : vector<22x2xf32> to vector<16x2xf32>
      %59 = vector.broadcast %57 : f32 to vector<16x2xf32>
      %60 = arith.mulf %59, %58 : vector<16x2xf32>
      %61 = arith.addf %52, %60 : vector<16x2xf32>
      %c8 = arith.constant 8 : index
      %62 = memref.load %arg1[%c8] : memref<98xf32, #tpu.memory_space<smem>>
      %63 = vector.extract_strided_slice %56 {offsets = [1, 0], sizes = [16, 2], strides = [1, 1]} : vector<22x2xf32> to vector<16x2xf32>
      %64 = vector.broadcast %62 : f32 to vector<16x2xf32>
      %65 = arith.mulf %64, %63 : vector<16x2xf32>
      %66 = arith.addf %61, %65 : vector<16x2xf32>
      %c9 = arith.constant 9 : index
      %67 = memref.load %arg1[%c9] : memref<98xf32, #tpu.memory_space<smem>>
      %68 = vector.extract_strided_slice %56 {offsets = [2, 0], sizes = [16, 2], strides = [1, 1]} : vector<22x2xf32> to vector<16x2xf32>
      %69 = vector.broadcast %67 : f32 to vector<16x2xf32>
      %70 = arith.mulf %69, %68 : vector<16x2xf32>
      %71 = arith.addf %66, %70 : vector<16x2xf32>
      %c10 = arith.constant 10 : index
      %72 = memref.load %arg1[%c10] : memref<98xf32, #tpu.memory_space<smem>>
      %73 = vector.extract_strided_slice %56 {offsets = [3, 0], sizes = [16, 2], strides = [1, 1]} : vector<22x2xf32> to vector<16x2xf32>
      %74 = vector.broadcast %72 : f32 to vector<16x2xf32>
      %75 = arith.mulf %74, %73 : vector<16x2xf32>
      %76 = arith.addf %71, %75 : vector<16x2xf32>
      %c11 = arith.constant 11 : index
      %77 = memref.load %arg1[%c11] : memref<98xf32, #tpu.memory_space<smem>>
      %78 = vector.extract_strided_slice %56 {offsets = [4, 0], sizes = [16, 2], strides = [1, 1]} : vector<22x2xf32> to vector<16x2xf32>
      %79 = vector.broadcast %77 : f32 to vector<16x2xf32>
      %80 = arith.mulf %79, %78 : vector<16x2xf32>
      %81 = arith.addf %76, %80 : vector<16x2xf32>
      %c12 = arith.constant 12 : index
      %82 = memref.load %arg1[%c12] : memref<98xf32, #tpu.memory_space<smem>>
      %83 = vector.extract_strided_slice %56 {offsets = [5, 0], sizes = [16, 2], strides = [1, 1]} : vector<22x2xf32> to vector<16x2xf32>
      %84 = vector.broadcast %82 : f32 to vector<16x2xf32>
      %85 = arith.mulf %84, %83 : vector<16x2xf32>
      %86 = arith.addf %81, %85 : vector<16x2xf32>
      %c13 = arith.constant 13 : index
      %87 = memref.load %arg1[%c13] : memref<98xf32, #tpu.memory_space<smem>>
      %88 = vector.extract_strided_slice %56 {offsets = [6, 0], sizes = [16, 2], strides = [1, 1]} : vector<22x2xf32> to vector<16x2xf32>
      %89 = vector.broadcast %87 : f32 to vector<16x2xf32>
      %90 = arith.mulf %89, %88 : vector<16x2xf32>
      %91 = arith.addf %86, %90 : vector<16x2xf32>
      %c2_i32 = arith.constant 2 : i32
      %92 = arith.addi %13, %c2_i32 : i32
      %c0_34 = arith.constant 0 : index
      %93 = arith.index_cast %92 : i32 to index
      %c0_35 = arith.constant 0 : index
      %c0_36 = arith.constant 0 : index
      %94 = vector.load %arg5[%c0_34, %93, %c0_35, %c0_36] : memref<2x22x22x2xf32, #tpu.memory_space<vmem>>, vector<1x1x22x2xf32>
      %95 = vector.shape_cast %94 : vector<1x1x22x2xf32> to vector<22x2xf32>
      %c14 = arith.constant 14 : index
      %96 = memref.load %arg1[%c14] : memref<98xf32, #tpu.memory_space<smem>>
      %97 = vector.extract_strided_slice %95 {offsets = [0, 0], sizes = [16, 2], strides = [1, 1]} : vector<22x2xf32> to vector<16x2xf32>
      %98 = vector.broadcast %96 : f32 to vector<16x2xf32>
      %99 = arith.mulf %98, %97 : vector<16x2xf32>
      %100 = arith.addf %91, %99 : vector<16x2xf32>
      %c15 = arith.constant 15 : index
      %101 = memref.load %arg1[%c15] : memref<98xf32, #tpu.memory_space<smem>>
      %102 = vector.extract_strided_slice %95 {offsets = [1, 0], sizes = [16, 2], strides = [1, 1]} : vector<22x2xf32> to vector<16x2xf32>
      %103 = vector.broadcast %101 : f32 to vector<16x2xf32>
      %104 = arith.mulf %103, %102 : vector<16x2xf32>
      %105 = arith.addf %100, %104 : vector<16x2xf32>
      %c16 = arith.constant 16 : index
      %106 = memref.load %arg1[%c16] : memref<98xf32, #tpu.memory_space<smem>>
      %107 = vector.extract_strided_slice %95 {offsets = [2, 0], sizes = [16, 2], strides = [1, 1]} : vector<22x2xf32> to vector<16x2xf32>
      %108 = vector.broadcast %106 : f32 to vector<16x2xf32>
      %109 = arith.mulf %108, %107 : vector<16x2xf32>
      %110 = arith.addf %105, %109 : vector<16x2xf32>
      %c17 = arith.constant 17 : index
      %111 = memref.load %arg1[%c17] : memref<98xf32, #tpu.memory_space<smem>>
      %112 = vector.extract_strided_slice %95 {offsets = [3, 0], sizes = [16, 2], strides = [1, 1]} : vector<22x2xf32> to vector<16x2xf32>
      %113 = vector.broadcast %111 : f32 to vector<16x2xf32>
      %114 = arith.mulf %113, %112 : vector<16x2xf32>
      %115 = arith.addf %110, %114 : vector<16x2xf32>
      %c18 = arith.constant 18 : index
      %116 = memref.load %arg1[%c18] : memref<98xf32, #tpu.memory_space<smem>>
      %117 = vector.extract_strided_slice %95 {offsets = [4, 0], sizes = [16, 2], strides = [1, 1]} : vector<22x2xf32> to vector<16x2xf32>
      %118 = vector.broadcast %116 : f32 to vector<16x2xf32>
      %119 = arith.mulf %118, %117 : vector<16x2xf32>
      %120 = arith.addf %115, %119 : vector<16x2xf32>
      %c19_37 = arith.constant 19 : index
      %121 = memref.load %arg1[%c19_37] : memref<98xf32, #tpu.memory_space<smem>>
      %122 = vector.extract_strided_slice %95 {offsets = [5, 0], sizes = [16, 2], strides = [1, 1]} : vector<22x2xf32> to vector<16x2xf32>
      %123 = vector.broadcast %121 : f32 to vector<16x2xf32>
      %124 = arith.mulf %123, %122 : vector<16x2xf32>
      %125 = arith.addf %120, %124 : vector<16x2xf32>
      %c20 = arith.constant 20 : index
      %126 = memref.load %arg1[%c20] : memref<98xf32, #tpu.memory_space<smem>>
      %127 = vector.extract_strided_slice %95 {offsets = [6, 0], sizes = [16, 2], strides = [1, 1]} : vector<22x2xf32> to vector<16x2xf32>
      %128 = vector.broadcast %126 : f32 to vector<16x2xf32>
      %129 = arith.mulf %128, %127 : vector<16x2xf32>
      %130 = arith.addf %125, %129 : vector<16x2xf32>
      %c3_i32 = arith.constant 3 : i32
      %131 = arith.addi %13, %c3_i32 : i32
      %c0_38 = arith.constant 0 : index
      %132 = arith.index_cast %131 : i32 to index
      %c0_39 = arith.constant 0 : index
      %c0_40 = arith.constant 0 : index
      %133 = vector.load %arg5[%c0_38, %132, %c0_39, %c0_40] : memref<2x22x22x2xf32, #tpu.memory_space<vmem>>, vector<1x1x22x2xf32>
      %134 = vector.shape_cast %133 : vector<1x1x22x2xf32> to vector<22x2xf32>
      %c21 = arith.constant 21 : index
      %135 = memref.load %arg1[%c21] : memref<98xf32, #tpu.memory_space<smem>>
      %136 = vector.extract_strided_slice %134 {offsets = [0, 0], sizes = [16, 2], strides = [1, 1]} : vector<22x2xf32> to vector<16x2xf32>
      %137 = vector.broadcast %135 : f32 to vector<16x2xf32>
      %138 = arith.mulf %137, %136 : vector<16x2xf32>
      %139 = arith.addf %130, %138 : vector<16x2xf32>
      %c22 = arith.constant 22 : index
      %140 = memref.load %arg1[%c22] : memref<98xf32, #tpu.memory_space<smem>>
      %141 = vector.extract_strided_slice %134 {offsets = [1, 0], sizes = [16, 2], strides = [1, 1]} : vector<22x2xf32> to vector<16x2xf32>
      %142 = vector.broadcast %140 : f32 to vector<16x2xf32>
      %143 = arith.mulf %142, %141 : vector<16x2xf32>
      %144 = arith.addf %139, %143 : vector<16x2xf32>
      %c23 = arith.constant 23 : index
      %145 = memref.load %arg1[%c23] : memref<98xf32, #tpu.memory_space<smem>>
      %146 = vector.extract_strided_slice %134 {offsets = [2, 0], sizes = [16, 2], strides = [1, 1]} : vector<22x2xf32> to vector<16x2xf32>
      %147 = vector.broadcast %145 : f32 to vector<16x2xf32>
      %148 = arith.mulf %147, %146 : vector<16x2xf32>
      %149 = arith.addf %144, %148 : vector<16x2xf32>
      %c24 = arith.constant 24 : index
      %150 = memref.load %arg1[%c24] : memref<98xf32, #tpu.memory_space<smem>>
      %151 = vector.extract_strided_slice %134 {offsets = [3, 0], sizes = [16, 2], strides = [1, 1]} : vector<22x2xf32> to vector<16x2xf32>
      %152 = vector.broadcast %150 : f32 to vector<16x2xf32>
      %153 = arith.mulf %152, %151 : vector<16x2xf32>
      %154 = arith.addf %149, %153 : vector<16x2xf32>
      %c25 = arith.constant 25 : index
      %155 = memref.load %arg1[%c25] : memref<98xf32, #tpu.memory_space<smem>>
      %156 = vector.extract_strided_slice %134 {offsets = [4, 0], sizes = [16, 2], strides = [1, 1]} : vector<22x2xf32> to vector<16x2xf32>
      %157 = vector.broadcast %155 : f32 to vector<16x2xf32>
      %158 = arith.mulf %157, %156 : vector<16x2xf32>
      %159 = arith.addf %154, %158 : vector<16x2xf32>
      %c26 = arith.constant 26 : index
      %160 = memref.load %arg1[%c26] : memref<98xf32, #tpu.memory_space<smem>>
      %161 = vector.extract_strided_slice %134 {offsets = [5, 0], sizes = [16, 2], strides = [1, 1]} : vector<22x2xf32> to vector<16x2xf32>
      %162 = vector.broadcast %160 : f32 to vector<16x2xf32>
      %163 = arith.mulf %162, %161 : vector<16x2xf32>
      %164 = arith.addf %159, %163 : vector<16x2xf32>
      %c27 = arith.constant 27 : index
      %165 = memref.load %arg1[%c27] : memref<98xf32, #tpu.memory_space<smem>>
      %166 = vector.extract_strided_slice %134 {offsets = [6, 0], sizes = [16, 2], strides = [1, 1]} : vector<22x2xf32> to vector<16x2xf32>
      %167 = vector.broadcast %165 : f32 to vector<16x2xf32>
      %168 = arith.mulf %167, %166 : vector<16x2xf32>
      %169 = arith.addf %164, %168 : vector<16x2xf32>
      %c4_i32 = arith.constant 4 : i32
      %170 = arith.addi %13, %c4_i32 : i32
      %c0_41 = arith.constant 0 : index
      %171 = arith.index_cast %170 : i32 to index
      %c0_42 = arith.constant 0 : index
      %c0_43 = arith.constant 0 : index
      %172 = vector.load %arg5[%c0_41, %171, %c0_42, %c0_43] : memref<2x22x22x2xf32, #tpu.memory_space<vmem>>, vector<1x1x22x2xf32>
      %173 = vector.shape_cast %172 : vector<1x1x22x2xf32> to vector<22x2xf32>
      %c28 = arith.constant 28 : index
      %174 = memref.load %arg1[%c28] : memref<98xf32, #tpu.memory_space<smem>>
      %175 = vector.extract_strided_slice %173 {offsets = [0, 0], sizes = [16, 2], strides = [1, 1]} : vector<22x2xf32> to vector<16x2xf32>
      %176 = vector.broadcast %174 : f32 to vector<16x2xf32>
      %177 = arith.mulf %176, %175 : vector<16x2xf32>
      %178 = arith.addf %169, %177 : vector<16x2xf32>
      %c29 = arith.constant 29 : index
      %179 = memref.load %arg1[%c29] : memref<98xf32, #tpu.memory_space<smem>>
      %180 = vector.extract_strided_slice %173 {offsets = [1, 0], sizes = [16, 2], strides = [1, 1]} : vector<22x2xf32> to vector<16x2xf32>
      %181 = vector.broadcast %179 : f32 to vector<16x2xf32>
      %182 = arith.mulf %181, %180 : vector<16x2xf32>
      %183 = arith.addf %178, %182 : vector<16x2xf32>
      %c30 = arith.constant 30 : index
      %184 = memref.load %arg1[%c30] : memref<98xf32, #tpu.memory_space<smem>>
      %185 = vector.extract_strided_slice %173 {offsets = [2, 0], sizes = [16, 2], strides = [1, 1]} : vector<22x2xf32> to vector<16x2xf32>
      %186 = vector.broadcast %184 : f32 to vector<16x2xf32>
      %187 = arith.mulf %186, %185 : vector<16x2xf32>
      %188 = arith.addf %183, %187 : vector<16x2xf32>
      %c31 = arith.constant 31 : index
      %189 = memref.load %arg1[%c31] : memref<98xf32, #tpu.memory_space<smem>>
      %190 = vector.extract_strided_slice %173 {offsets = [3, 0], sizes = [16, 2], strides = [1, 1]} : vector<22x2xf32> to vector<16x2xf32>
      %191 = vector.broadcast %189 : f32 to vector<16x2xf32>
      %192 = arith.mulf %191, %190 : vector<16x2xf32>
      %193 = arith.addf %188, %192 : vector<16x2xf32>
      %c32 = arith.constant 32 : index
      %194 = memref.load %arg1[%c32] : memref<98xf32, #tpu.memory_space<smem>>
      %195 = vector.extract_strided_slice %173 {offsets = [4, 0], sizes = [16, 2], strides = [1, 1]} : vector<22x2xf32> to vector<16x2xf32>
      %196 = vector.broadcast %194 : f32 to vector<16x2xf32>
      %197 = arith.mulf %196, %195 : vector<16x2xf32>
      %198 = arith.addf %193, %197 : vector<16x2xf32>
      %c33 = arith.constant 33 : index
      %199 = memref.load %arg1[%c33] : memref<98xf32, #tpu.memory_space<smem>>
      %200 = vector.extract_strided_slice %173 {offsets = [5, 0], sizes = [16, 2], strides = [1, 1]} : vector<22x2xf32> to vector<16x2xf32>
      %201 = vector.broadcast %199 : f32 to vector<16x2xf32>
      %202 = arith.mulf %201, %200 : vector<16x2xf32>
      %203 = arith.addf %198, %202 : vector<16x2xf32>
      %c34 = arith.constant 34 : index
      %204 = memref.load %arg1[%c34] : memref<98xf32, #tpu.memory_space<smem>>
      %205 = vector.extract_strided_slice %173 {offsets = [6, 0], sizes = [16, 2], strides = [1, 1]} : vector<22x2xf32> to vector<16x2xf32>
      %206 = vector.broadcast %204 : f32 to vector<16x2xf32>
      %207 = arith.mulf %206, %205 : vector<16x2xf32>
      %208 = arith.addf %203, %207 : vector<16x2xf32>
      %c5_i32 = arith.constant 5 : i32
      %209 = arith.addi %13, %c5_i32 : i32
      %c0_44 = arith.constant 0 : index
      %210 = arith.index_cast %209 : i32 to index
      %c0_45 = arith.constant 0 : index
      %c0_46 = arith.constant 0 : index
      %211 = vector.load %arg5[%c0_44, %210, %c0_45, %c0_46] : memref<2x22x22x2xf32, #tpu.memory_space<vmem>>, vector<1x1x22x2xf32>
      %212 = vector.shape_cast %211 : vector<1x1x22x2xf32> to vector<22x2xf32>
      %c35 = arith.constant 35 : index
      %213 = memref.load %arg1[%c35] : memref<98xf32, #tpu.memory_space<smem>>
      %214 = vector.extract_strided_slice %212 {offsets = [0, 0], sizes = [16, 2], strides = [1, 1]} : vector<22x2xf32> to vector<16x2xf32>
      %215 = vector.broadcast %213 : f32 to vector<16x2xf32>
      %216 = arith.mulf %215, %214 : vector<16x2xf32>
      %217 = arith.addf %208, %216 : vector<16x2xf32>
      %c36 = arith.constant 36 : index
      %218 = memref.load %arg1[%c36] : memref<98xf32, #tpu.memory_space<smem>>
      %219 = vector.extract_strided_slice %212 {offsets = [1, 0], sizes = [16, 2], strides = [1, 1]} : vector<22x2xf32> to vector<16x2xf32>
      %220 = vector.broadcast %218 : f32 to vector<16x2xf32>
      %221 = arith.mulf %220, %219 : vector<16x2xf32>
      %222 = arith.addf %217, %221 : vector<16x2xf32>
      %c37 = arith.constant 37 : index
      %223 = memref.load %arg1[%c37] : memref<98xf32, #tpu.memory_space<smem>>
      %224 = vector.extract_strided_slice %212 {offsets = [2, 0], sizes = [16, 2], strides = [1, 1]} : vector<22x2xf32> to vector<16x2xf32>
      %225 = vector.broadcast %223 : f32 to vector<16x2xf32>
      %226 = arith.mulf %225, %224 : vector<16x2xf32>
      %227 = arith.addf %222, %226 : vector<16x2xf32>
      %c38 = arith.constant 38 : index
      %228 = memref.load %arg1[%c38] : memref<98xf32, #tpu.memory_space<smem>>
      %229 = vector.extract_strided_slice %212 {offsets = [3, 0], sizes = [16, 2], strides = [1, 1]} : vector<22x2xf32> to vector<16x2xf32>
      %230 = vector.broadcast %228 : f32 to vector<16x2xf32>
      %231 = arith.mulf %230, %229 : vector<16x2xf32>
      %232 = arith.addf %227, %231 : vector<16x2xf32>
      %c39 = arith.constant 39 : index
      %233 = memref.load %arg1[%c39] : memref<98xf32, #tpu.memory_space<smem>>
      %234 = vector.extract_strided_slice %212 {offsets = [4, 0], sizes = [16, 2], strides = [1, 1]} : vector<22x2xf32> to vector<16x2xf32>
      %235 = vector.broadcast %233 : f32 to vector<16x2xf32>
      %236 = arith.mulf %235, %234 : vector<16x2xf32>
      %237 = arith.addf %232, %236 : vector<16x2xf32>
      %c40 = arith.constant 40 : index
      %238 = memref.load %arg1[%c40] : memref<98xf32, #tpu.memory_space<smem>>
      %239 = vector.extract_strided_slice %212 {offsets = [5, 0], sizes = [16, 2], strides = [1, 1]} : vector<22x2xf32> to vector<16x2xf32>
      %240 = vector.broadcast %238 : f32 to vector<16x2xf32>
      %241 = arith.mulf %240, %239 : vector<16x2xf32>
      %242 = arith.addf %237, %241 : vector<16x2xf32>
      %c41 = arith.constant 41 : index
      %243 = memref.load %arg1[%c41] : memref<98xf32, #tpu.memory_space<smem>>
      %244 = vector.extract_strided_slice %212 {offsets = [6, 0], sizes = [16, 2], strides = [1, 1]} : vector<22x2xf32> to vector<16x2xf32>
      %245 = vector.broadcast %243 : f32 to vector<16x2xf32>
      %246 = arith.mulf %245, %244 : vector<16x2xf32>
      %247 = arith.addf %242, %246 : vector<16x2xf32>
      %c6_i32 = arith.constant 6 : i32
      %248 = arith.addi %13, %c6_i32 : i32
      %c0_47 = arith.constant 0 : index
      %249 = arith.index_cast %248 : i32 to index
      %c0_48 = arith.constant 0 : index
      %c0_49 = arith.constant 0 : index
      %250 = vector.load %arg5[%c0_47, %249, %c0_48, %c0_49] : memref<2x22x22x2xf32, #tpu.memory_space<vmem>>, vector<1x1x22x2xf32>
      %251 = vector.shape_cast %250 : vector<1x1x22x2xf32> to vector<22x2xf32>
      %c42 = arith.constant 42 : index
      %252 = memref.load %arg1[%c42] : memref<98xf32, #tpu.memory_space<smem>>
      %253 = vector.extract_strided_slice %251 {offsets = [0, 0], sizes = [16, 2], strides = [1, 1]} : vector<22x2xf32> to vector<16x2xf32>
      %254 = vector.broadcast %252 : f32 to vector<16x2xf32>
      %255 = arith.mulf %254, %253 : vector<16x2xf32>
      %256 = arith.addf %247, %255 : vector<16x2xf32>
      %c43 = arith.constant 43 : index
      %257 = memref.load %arg1[%c43] : memref<98xf32, #tpu.memory_space<smem>>
      %258 = vector.extract_strided_slice %251 {offsets = [1, 0], sizes = [16, 2], strides = [1, 1]} : vector<22x2xf32> to vector<16x2xf32>
      %259 = vector.broadcast %257 : f32 to vector<16x2xf32>
      %260 = arith.mulf %259, %258 : vector<16x2xf32>
      %261 = arith.addf %256, %260 : vector<16x2xf32>
      %c44 = arith.constant 44 : index
      %262 = memref.load %arg1[%c44] : memref<98xf32, #tpu.memory_space<smem>>
      %263 = vector.extract_strided_slice %251 {offsets = [2, 0], sizes = [16, 2], strides = [1, 1]} : vector<22x2xf32> to vector<16x2xf32>
      %264 = vector.broadcast %262 : f32 to vector<16x2xf32>
      %265 = arith.mulf %264, %263 : vector<16x2xf32>
      %266 = arith.addf %261, %265 : vector<16x2xf32>
      %c45 = arith.constant 45 : index
      %267 = memref.load %arg1[%c45] : memref<98xf32, #tpu.memory_space<smem>>
      %268 = vector.extract_strided_slice %251 {offsets = [3, 0], sizes = [16, 2], strides = [1, 1]} : vector<22x2xf32> to vector<16x2xf32>
      %269 = vector.broadcast %267 : f32 to vector<16x2xf32>
      %270 = arith.mulf %269, %268 : vector<16x2xf32>
      %271 = arith.addf %266, %270 : vector<16x2xf32>
      %c46 = arith.constant 46 : index
      %272 = memref.load %arg1[%c46] : memref<98xf32, #tpu.memory_space<smem>>
      %273 = vector.extract_strided_slice %251 {offsets = [4, 0], sizes = [16, 2], strides = [1, 1]} : vector<22x2xf32> to vector<16x2xf32>
      %274 = vector.broadcast %272 : f32 to vector<16x2xf32>
      %275 = arith.mulf %274, %273 : vector<16x2xf32>
      %276 = arith.addf %271, %275 : vector<16x2xf32>
      %c47 = arith.constant 47 : index
      %277 = memref.load %arg1[%c47] : memref<98xf32, #tpu.memory_space<smem>>
      %278 = vector.extract_strided_slice %251 {offsets = [5, 0], sizes = [16, 2], strides = [1, 1]} : vector<22x2xf32> to vector<16x2xf32>
      %279 = vector.broadcast %277 : f32 to vector<16x2xf32>
      %280 = arith.mulf %279, %278 : vector<16x2xf32>
      %281 = arith.addf %276, %280 : vector<16x2xf32>
      %c48 = arith.constant 48 : index
      %282 = memref.load %arg1[%c48] : memref<98xf32, #tpu.memory_space<smem>>
      %283 = vector.extract_strided_slice %251 {offsets = [6, 0], sizes = [16, 2], strides = [1, 1]} : vector<22x2xf32> to vector<16x2xf32>
      %284 = vector.broadcast %282 : f32 to vector<16x2xf32>
      %285 = arith.mulf %284, %283 : vector<16x2xf32>
      %286 = arith.addf %281, %285 : vector<16x2xf32>
      %c0_i32_50 = arith.constant 0 : i32
      %287 = arith.addi %13, %c0_i32_50 : i32
      %c1_51 = arith.constant 1 : index
      %288 = arith.index_cast %287 : i32 to index
      %c0_52 = arith.constant 0 : index
      %c0_53 = arith.constant 0 : index
      %289 = vector.load %arg5[%c1_51, %288, %c0_52, %c0_53] : memref<2x22x22x2xf32, #tpu.memory_space<vmem>>, vector<1x1x22x2xf32>
      %290 = vector.shape_cast %289 : vector<1x1x22x2xf32> to vector<22x2xf32>
      %c49 = arith.constant 49 : index
      %291 = memref.load %arg1[%c49] : memref<98xf32, #tpu.memory_space<smem>>
      %292 = vector.extract_strided_slice %290 {offsets = [0, 0], sizes = [16, 2], strides = [1, 1]} : vector<22x2xf32> to vector<16x2xf32>
      %293 = vector.broadcast %291 : f32 to vector<16x2xf32>
      %294 = arith.mulf %293, %292 : vector<16x2xf32>
      %295 = arith.addf %286, %294 : vector<16x2xf32>
      %c50 = arith.constant 50 : index
      %296 = memref.load %arg1[%c50] : memref<98xf32, #tpu.memory_space<smem>>
      %297 = vector.extract_strided_slice %290 {offsets = [1, 0], sizes = [16, 2], strides = [1, 1]} : vector<22x2xf32> to vector<16x2xf32>
      %298 = vector.broadcast %296 : f32 to vector<16x2xf32>
      %299 = arith.mulf %298, %297 : vector<16x2xf32>
      %300 = arith.addf %295, %299 : vector<16x2xf32>
      %c51 = arith.constant 51 : index
      %301 = memref.load %arg1[%c51] : memref<98xf32, #tpu.memory_space<smem>>
      %302 = vector.extract_strided_slice %290 {offsets = [2, 0], sizes = [16, 2], strides = [1, 1]} : vector<22x2xf32> to vector<16x2xf32>
      %303 = vector.broadcast %301 : f32 to vector<16x2xf32>
      %304 = arith.mulf %303, %302 : vector<16x2xf32>
      %305 = arith.addf %300, %304 : vector<16x2xf32>
      %c52 = arith.constant 52 : index
      %306 = memref.load %arg1[%c52] : memref<98xf32, #tpu.memory_space<smem>>
      %307 = vector.extract_strided_slice %290 {offsets = [3, 0], sizes = [16, 2], strides = [1, 1]} : vector<22x2xf32> to vector<16x2xf32>
      %308 = vector.broadcast %306 : f32 to vector<16x2xf32>
      %309 = arith.mulf %308, %307 : vector<16x2xf32>
      %310 = arith.addf %305, %309 : vector<16x2xf32>
      %c53 = arith.constant 53 : index
      %311 = memref.load %arg1[%c53] : memref<98xf32, #tpu.memory_space<smem>>
      %312 = vector.extract_strided_slice %290 {offsets = [4, 0], sizes = [16, 2], strides = [1, 1]} : vector<22x2xf32> to vector<16x2xf32>
      %313 = vector.broadcast %311 : f32 to vector<16x2xf32>
      %314 = arith.mulf %313, %312 : vector<16x2xf32>
      %315 = arith.addf %310, %314 : vector<16x2xf32>
      %c54 = arith.constant 54 : index
      %316 = memref.load %arg1[%c54] : memref<98xf32, #tpu.memory_space<smem>>
      %317 = vector.extract_strided_slice %290 {offsets = [5, 0], sizes = [16, 2], strides = [1, 1]} : vector<22x2xf32> to vector<16x2xf32>
      %318 = vector.broadcast %316 : f32 to vector<16x2xf32>
      %319 = arith.mulf %318, %317 : vector<16x2xf32>
      %320 = arith.addf %315, %319 : vector<16x2xf32>
      %c55 = arith.constant 55 : index
      %321 = memref.load %arg1[%c55] : memref<98xf32, #tpu.memory_space<smem>>
      %322 = vector.extract_strided_slice %290 {offsets = [6, 0], sizes = [16, 2], strides = [1, 1]} : vector<22x2xf32> to vector<16x2xf32>
      %323 = vector.broadcast %321 : f32 to vector<16x2xf32>
      %324 = arith.mulf %323, %322 : vector<16x2xf32>
      %325 = arith.addf %320, %324 : vector<16x2xf32>
      %c1_i32_54 = arith.constant 1 : i32
      %326 = arith.addi %13, %c1_i32_54 : i32
      %c1_55 = arith.constant 1 : index
      %327 = arith.index_cast %326 : i32 to index
      %c0_56 = arith.constant 0 : index
      %c0_57 = arith.constant 0 : index
      %328 = vector.load %arg5[%c1_55, %327, %c0_56, %c0_57] : memref<2x22x22x2xf32, #tpu.memory_space<vmem>>, vector<1x1x22x2xf32>
      %329 = vector.shape_cast %328 : vector<1x1x22x2xf32> to vector<22x2xf32>
      %c56 = arith.constant 56 : index
      %330 = memref.load %arg1[%c56] : memref<98xf32, #tpu.memory_space<smem>>
      %331 = vector.extract_strided_slice %329 {offsets = [0, 0], sizes = [16, 2], strides = [1, 1]} : vector<22x2xf32> to vector<16x2xf32>
      %332 = vector.broadcast %330 : f32 to vector<16x2xf32>
      %333 = arith.mulf %332, %331 : vector<16x2xf32>
      %334 = arith.addf %325, %333 : vector<16x2xf32>
      %c57 = arith.constant 57 : index
      %335 = memref.load %arg1[%c57] : memref<98xf32, #tpu.memory_space<smem>>
      %336 = vector.extract_strided_slice %329 {offsets = [1, 0], sizes = [16, 2], strides = [1, 1]} : vector<22x2xf32> to vector<16x2xf32>
      %337 = vector.broadcast %335 : f32 to vector<16x2xf32>
      %338 = arith.mulf %337, %336 : vector<16x2xf32>
      %339 = arith.addf %334, %338 : vector<16x2xf32>
      %c58 = arith.constant 58 : index
      %340 = memref.load %arg1[%c58] : memref<98xf32, #tpu.memory_space<smem>>
      %341 = vector.extract_strided_slice %329 {offsets = [2, 0], sizes = [16, 2], strides = [1, 1]} : vector<22x2xf32> to vector<16x2xf32>
      %342 = vector.broadcast %340 : f32 to vector<16x2xf32>
      %343 = arith.mulf %342, %341 : vector<16x2xf32>
      %344 = arith.addf %339, %343 : vector<16x2xf32>
      %c59 = arith.constant 59 : index
      %345 = memref.load %arg1[%c59] : memref<98xf32, #tpu.memory_space<smem>>
      %346 = vector.extract_strided_slice %329 {offsets = [3, 0], sizes = [16, 2], strides = [1, 1]} : vector<22x2xf32> to vector<16x2xf32>
      %347 = vector.broadcast %345 : f32 to vector<16x2xf32>
      %348 = arith.mulf %347, %346 : vector<16x2xf32>
      %349 = arith.addf %344, %348 : vector<16x2xf32>
      %c60 = arith.constant 60 : index
      %350 = memref.load %arg1[%c60] : memref<98xf32, #tpu.memory_space<smem>>
      %351 = vector.extract_strided_slice %329 {offsets = [4, 0], sizes = [16, 2], strides = [1, 1]} : vector<22x2xf32> to vector<16x2xf32>
      %352 = vector.broadcast %350 : f32 to vector<16x2xf32>
      %353 = arith.mulf %352, %351 : vector<16x2xf32>
      %354 = arith.addf %349, %353 : vector<16x2xf32>
      %c61 = arith.constant 61 : index
      %355 = memref.load %arg1[%c61] : memref<98xf32, #tpu.memory_space<smem>>
      %356 = vector.extract_strided_slice %329 {offsets = [5, 0], sizes = [16, 2], strides = [1, 1]} : vector<22x2xf32> to vector<16x2xf32>
      %357 = vector.broadcast %355 : f32 to vector<16x2xf32>
      %358 = arith.mulf %357, %356 : vector<16x2xf32>
      %359 = arith.addf %354, %358 : vector<16x2xf32>
      %c62 = arith.constant 62 : index
      %360 = memref.load %arg1[%c62] : memref<98xf32, #tpu.memory_space<smem>>
      %361 = vector.extract_strided_slice %329 {offsets = [6, 0], sizes = [16, 2], strides = [1, 1]} : vector<22x2xf32> to vector<16x2xf32>
      %362 = vector.broadcast %360 : f32 to vector<16x2xf32>
      %363 = arith.mulf %362, %361 : vector<16x2xf32>
      %364 = arith.addf %359, %363 : vector<16x2xf32>
      %c2_i32_58 = arith.constant 2 : i32
      %365 = arith.addi %13, %c2_i32_58 : i32
      %c1_59 = arith.constant 1 : index
      %366 = arith.index_cast %365 : i32 to index
      %c0_60 = arith.constant 0 : index
      %c0_61 = arith.constant 0 : index
      %367 = vector.load %arg5[%c1_59, %366, %c0_60, %c0_61] : memref<2x22x22x2xf32, #tpu.memory_space<vmem>>, vector<1x1x22x2xf32>
      %368 = vector.shape_cast %367 : vector<1x1x22x2xf32> to vector<22x2xf32>
      %c63 = arith.constant 63 : index
      %369 = memref.load %arg1[%c63] : memref<98xf32, #tpu.memory_space<smem>>
      %370 = vector.extract_strided_slice %368 {offsets = [0, 0], sizes = [16, 2], strides = [1, 1]} : vector<22x2xf32> to vector<16x2xf32>
      %371 = vector.broadcast %369 : f32 to vector<16x2xf32>
      %372 = arith.mulf %371, %370 : vector<16x2xf32>
      %373 = arith.addf %364, %372 : vector<16x2xf32>
      %c64 = arith.constant 64 : index
      %374 = memref.load %arg1[%c64] : memref<98xf32, #tpu.memory_space<smem>>
      %375 = vector.extract_strided_slice %368 {offsets = [1, 0], sizes = [16, 2], strides = [1, 1]} : vector<22x2xf32> to vector<16x2xf32>
      %376 = vector.broadcast %374 : f32 to vector<16x2xf32>
      %377 = arith.mulf %376, %375 : vector<16x2xf32>
      %378 = arith.addf %373, %377 : vector<16x2xf32>
      %c65 = arith.constant 65 : index
      %379 = memref.load %arg1[%c65] : memref<98xf32, #tpu.memory_space<smem>>
      %380 = vector.extract_strided_slice %368 {offsets = [2, 0], sizes = [16, 2], strides = [1, 1]} : vector<22x2xf32> to vector<16x2xf32>
      %381 = vector.broadcast %379 : f32 to vector<16x2xf32>
      %382 = arith.mulf %381, %380 : vector<16x2xf32>
      %383 = arith.addf %378, %382 : vector<16x2xf32>
      %c66 = arith.constant 66 : index
      %384 = memref.load %arg1[%c66] : memref<98xf32, #tpu.memory_space<smem>>
      %385 = vector.extract_strided_slice %368 {offsets = [3, 0], sizes = [16, 2], strides = [1, 1]} : vector<22x2xf32> to vector<16x2xf32>
      %386 = vector.broadcast %384 : f32 to vector<16x2xf32>
      %387 = arith.mulf %386, %385 : vector<16x2xf32>
      %388 = arith.addf %383, %387 : vector<16x2xf32>
      %c67 = arith.constant 67 : index
      %389 = memref.load %arg1[%c67] : memref<98xf32, #tpu.memory_space<smem>>
      %390 = vector.extract_strided_slice %368 {offsets = [4, 0], sizes = [16, 2], strides = [1, 1]} : vector<22x2xf32> to vector<16x2xf32>
      %391 = vector.broadcast %389 : f32 to vector<16x2xf32>
      %392 = arith.mulf %391, %390 : vector<16x2xf32>
      %393 = arith.addf %388, %392 : vector<16x2xf32>
      %c68 = arith.constant 68 : index
      %394 = memref.load %arg1[%c68] : memref<98xf32, #tpu.memory_space<smem>>
      %395 = vector.extract_strided_slice %368 {offsets = [5, 0], sizes = [16, 2], strides = [1, 1]} : vector<22x2xf32> to vector<16x2xf32>
      %396 = vector.broadcast %394 : f32 to vector<16x2xf32>
      %397 = arith.mulf %396, %395 : vector<16x2xf32>
      %398 = arith.addf %393, %397 : vector<16x2xf32>
      %c69 = arith.constant 69 : index
      %399 = memref.load %arg1[%c69] : memref<98xf32, #tpu.memory_space<smem>>
      %400 = vector.extract_strided_slice %368 {offsets = [6, 0], sizes = [16, 2], strides = [1, 1]} : vector<22x2xf32> to vector<16x2xf32>
      %401 = vector.broadcast %399 : f32 to vector<16x2xf32>
      %402 = arith.mulf %401, %400 : vector<16x2xf32>
      %403 = arith.addf %398, %402 : vector<16x2xf32>
      %c3_i32_62 = arith.constant 3 : i32
      %404 = arith.addi %13, %c3_i32_62 : i32
      %c1_63 = arith.constant 1 : index
      %405 = arith.index_cast %404 : i32 to index
      %c0_64 = arith.constant 0 : index
      %c0_65 = arith.constant 0 : index
      %406 = vector.load %arg5[%c1_63, %405, %c0_64, %c0_65] : memref<2x22x22x2xf32, #tpu.memory_space<vmem>>, vector<1x1x22x2xf32>
      %407 = vector.shape_cast %406 : vector<1x1x22x2xf32> to vector<22x2xf32>
      %c70 = arith.constant 70 : index
      %408 = memref.load %arg1[%c70] : memref<98xf32, #tpu.memory_space<smem>>
      %409 = vector.extract_strided_slice %407 {offsets = [0, 0], sizes = [16, 2], strides = [1, 1]} : vector<22x2xf32> to vector<16x2xf32>
      %410 = vector.broadcast %408 : f32 to vector<16x2xf32>
      %411 = arith.mulf %410, %409 : vector<16x2xf32>
      %412 = arith.addf %403, %411 : vector<16x2xf32>
      %c71 = arith.constant 71 : index
      %413 = memref.load %arg1[%c71] : memref<98xf32, #tpu.memory_space<smem>>
      %414 = vector.extract_strided_slice %407 {offsets = [1, 0], sizes = [16, 2], strides = [1, 1]} : vector<22x2xf32> to vector<16x2xf32>
      %415 = vector.broadcast %413 : f32 to vector<16x2xf32>
      %416 = arith.mulf %415, %414 : vector<16x2xf32>
      %417 = arith.addf %412, %416 : vector<16x2xf32>
      %c72 = arith.constant 72 : index
      %418 = memref.load %arg1[%c72] : memref<98xf32, #tpu.memory_space<smem>>
      %419 = vector.extract_strided_slice %407 {offsets = [2, 0], sizes = [16, 2], strides = [1, 1]} : vector<22x2xf32> to vector<16x2xf32>
      %420 = vector.broadcast %418 : f32 to vector<16x2xf32>
      %421 = arith.mulf %420, %419 : vector<16x2xf32>
      %422 = arith.addf %417, %421 : vector<16x2xf32>
      %c73 = arith.constant 73 : index
      %423 = memref.load %arg1[%c73] : memref<98xf32, #tpu.memory_space<smem>>
      %424 = vector.extract_strided_slice %407 {offsets = [3, 0], sizes = [16, 2], strides = [1, 1]} : vector<22x2xf32> to vector<16x2xf32>
      %425 = vector.broadcast %423 : f32 to vector<16x2xf32>
      %426 = arith.mulf %425, %424 : vector<16x2xf32>
      %427 = arith.addf %422, %426 : vector<16x2xf32>
      %c74 = arith.constant 74 : index
      %428 = memref.load %arg1[%c74] : memref<98xf32, #tpu.memory_space<smem>>
      %429 = vector.extract_strided_slice %407 {offsets = [4, 0], sizes = [16, 2], strides = [1, 1]} : vector<22x2xf32> to vector<16x2xf32>
      %430 = vector.broadcast %428 : f32 to vector<16x2xf32>
      %431 = arith.mulf %430, %429 : vector<16x2xf32>
      %432 = arith.addf %427, %431 : vector<16x2xf32>
      %c75 = arith.constant 75 : index
      %433 = memref.load %arg1[%c75] : memref<98xf32, #tpu.memory_space<smem>>
      %434 = vector.extract_strided_slice %407 {offsets = [5, 0], sizes = [16, 2], strides = [1, 1]} : vector<22x2xf32> to vector<16x2xf32>
      %435 = vector.broadcast %433 : f32 to vector<16x2xf32>
      %436 = arith.mulf %435, %434 : vector<16x2xf32>
      %437 = arith.addf %432, %436 : vector<16x2xf32>
      %c76 = arith.constant 76 : index
      %438 = memref.load %arg1[%c76] : memref<98xf32, #tpu.memory_space<smem>>
      %439 = vector.extract_strided_slice %407 {offsets = [6, 0], sizes = [16, 2], strides = [1, 1]} : vector<22x2xf32> to vector<16x2xf32>
      %440 = vector.broadcast %438 : f32 to vector<16x2xf32>
      %441 = arith.mulf %440, %439 : vector<16x2xf32>
      %442 = arith.addf %437, %441 : vector<16x2xf32>
      %c4_i32_66 = arith.constant 4 : i32
      %443 = arith.addi %13, %c4_i32_66 : i32
      %c1_67 = arith.constant 1 : index
      %444 = arith.index_cast %443 : i32 to index
      %c0_68 = arith.constant 0 : index
      %c0_69 = arith.constant 0 : index
      %445 = vector.load %arg5[%c1_67, %444, %c0_68, %c0_69] : memref<2x22x22x2xf32, #tpu.memory_space<vmem>>, vector<1x1x22x2xf32>
      %446 = vector.shape_cast %445 : vector<1x1x22x2xf32> to vector<22x2xf32>
      %c77 = arith.constant 77 : index
      %447 = memref.load %arg1[%c77] : memref<98xf32, #tpu.memory_space<smem>>
      %448 = vector.extract_strided_slice %446 {offsets = [0, 0], sizes = [16, 2], strides = [1, 1]} : vector<22x2xf32> to vector<16x2xf32>
      %449 = vector.broadcast %447 : f32 to vector<16x2xf32>
      %450 = arith.mulf %449, %448 : vector<16x2xf32>
      %451 = arith.addf %442, %450 : vector<16x2xf32>
      %c78 = arith.constant 78 : index
      %452 = memref.load %arg1[%c78] : memref<98xf32, #tpu.memory_space<smem>>
      %453 = vector.extract_strided_slice %446 {offsets = [1, 0], sizes = [16, 2], strides = [1, 1]} : vector<22x2xf32> to vector<16x2xf32>
      %454 = vector.broadcast %452 : f32 to vector<16x2xf32>
      %455 = arith.mulf %454, %453 : vector<16x2xf32>
      %456 = arith.addf %451, %455 : vector<16x2xf32>
      %c79 = arith.constant 79 : index
      %457 = memref.load %arg1[%c79] : memref<98xf32, #tpu.memory_space<smem>>
      %458 = vector.extract_strided_slice %446 {offsets = [2, 0], sizes = [16, 2], strides = [1, 1]} : vector<22x2xf32> to vector<16x2xf32>
      %459 = vector.broadcast %457 : f32 to vector<16x2xf32>
      %460 = arith.mulf %459, %458 : vector<16x2xf32>
      %461 = arith.addf %456, %460 : vector<16x2xf32>
      %c80 = arith.constant 80 : index
      %462 = memref.load %arg1[%c80] : memref<98xf32, #tpu.memory_space<smem>>
      %463 = vector.extract_strided_slice %446 {offsets = [3, 0], sizes = [16, 2], strides = [1, 1]} : vector<22x2xf32> to vector<16x2xf32>
      %464 = vector.broadcast %462 : f32 to vector<16x2xf32>
      %465 = arith.mulf %464, %463 : vector<16x2xf32>
      %466 = arith.addf %461, %465 : vector<16x2xf32>
      %c81 = arith.constant 81 : index
      %467 = memref.load %arg1[%c81] : memref<98xf32, #tpu.memory_space<smem>>
      %468 = vector.extract_strided_slice %446 {offsets = [4, 0], sizes = [16, 2], strides = [1, 1]} : vector<22x2xf32> to vector<16x2xf32>
      %469 = vector.broadcast %467 : f32 to vector<16x2xf32>
      %470 = arith.mulf %469, %468 : vector<16x2xf32>
      %471 = arith.addf %466, %470 : vector<16x2xf32>
      %c82 = arith.constant 82 : index
      %472 = memref.load %arg1[%c82] : memref<98xf32, #tpu.memory_space<smem>>
      %473 = vector.extract_strided_slice %446 {offsets = [5, 0], sizes = [16, 2], strides = [1, 1]} : vector<22x2xf32> to vector<16x2xf32>
      %474 = vector.broadcast %472 : f32 to vector<16x2xf32>
      %475 = arith.mulf %474, %473 : vector<16x2xf32>
      %476 = arith.addf %471, %475 : vector<16x2xf32>
      %c83 = arith.constant 83 : index
      %477 = memref.load %arg1[%c83] : memref<98xf32, #tpu.memory_space<smem>>
      %478 = vector.extract_strided_slice %446 {offsets = [6, 0], sizes = [16, 2], strides = [1, 1]} : vector<22x2xf32> to vector<16x2xf32>
      %479 = vector.broadcast %477 : f32 to vector<16x2xf32>
      %480 = arith.mulf %479, %478 : vector<16x2xf32>
      %481 = arith.addf %476, %480 : vector<16x2xf32>
      %c5_i32_70 = arith.constant 5 : i32
      %482 = arith.addi %13, %c5_i32_70 : i32
      %c1_71 = arith.constant 1 : index
      %483 = arith.index_cast %482 : i32 to index
      %c0_72 = arith.constant 0 : index
      %c0_73 = arith.constant 0 : index
      %484 = vector.load %arg5[%c1_71, %483, %c0_72, %c0_73] : memref<2x22x22x2xf32, #tpu.memory_space<vmem>>, vector<1x1x22x2xf32>
      %485 = vector.shape_cast %484 : vector<1x1x22x2xf32> to vector<22x2xf32>
      %c84 = arith.constant 84 : index
      %486 = memref.load %arg1[%c84] : memref<98xf32, #tpu.memory_space<smem>>
      %487 = vector.extract_strided_slice %485 {offsets = [0, 0], sizes = [16, 2], strides = [1, 1]} : vector<22x2xf32> to vector<16x2xf32>
      %488 = vector.broadcast %486 : f32 to vector<16x2xf32>
      %489 = arith.mulf %488, %487 : vector<16x2xf32>
      %490 = arith.addf %481, %489 : vector<16x2xf32>
      %c85 = arith.constant 85 : index
      %491 = memref.load %arg1[%c85] : memref<98xf32, #tpu.memory_space<smem>>
      %492 = vector.extract_strided_slice %485 {offsets = [1, 0], sizes = [16, 2], strides = [1, 1]} : vector<22x2xf32> to vector<16x2xf32>
      %493 = vector.broadcast %491 : f32 to vector<16x2xf32>
      %494 = arith.mulf %493, %492 : vector<16x2xf32>
      %495 = arith.addf %490, %494 : vector<16x2xf32>
      %c86 = arith.constant 86 : index
      %496 = memref.load %arg1[%c86] : memref<98xf32, #tpu.memory_space<smem>>
      %497 = vector.extract_strided_slice %485 {offsets = [2, 0], sizes = [16, 2], strides = [1, 1]} : vector<22x2xf32> to vector<16x2xf32>
      %498 = vector.broadcast %496 : f32 to vector<16x2xf32>
      %499 = arith.mulf %498, %497 : vector<16x2xf32>
      %500 = arith.addf %495, %499 : vector<16x2xf32>
      %c87 = arith.constant 87 : index
      %501 = memref.load %arg1[%c87] : memref<98xf32, #tpu.memory_space<smem>>
      %502 = vector.extract_strided_slice %485 {offsets = [3, 0], sizes = [16, 2], strides = [1, 1]} : vector<22x2xf32> to vector<16x2xf32>
      %503 = vector.broadcast %501 : f32 to vector<16x2xf32>
      %504 = arith.mulf %503, %502 : vector<16x2xf32>
      %505 = arith.addf %500, %504 : vector<16x2xf32>
      %c88 = arith.constant 88 : index
      %506 = memref.load %arg1[%c88] : memref<98xf32, #tpu.memory_space<smem>>
      %507 = vector.extract_strided_slice %485 {offsets = [4, 0], sizes = [16, 2], strides = [1, 1]} : vector<22x2xf32> to vector<16x2xf32>
      %508 = vector.broadcast %506 : f32 to vector<16x2xf32>
      %509 = arith.mulf %508, %507 : vector<16x2xf32>
      %510 = arith.addf %505, %509 : vector<16x2xf32>
      %c89 = arith.constant 89 : index
      %511 = memref.load %arg1[%c89] : memref<98xf32, #tpu.memory_space<smem>>
      %512 = vector.extract_strided_slice %485 {offsets = [5, 0], sizes = [16, 2], strides = [1, 1]} : vector<22x2xf32> to vector<16x2xf32>
      %513 = vector.broadcast %511 : f32 to vector<16x2xf32>
      %514 = arith.mulf %513, %512 : vector<16x2xf32>
      %515 = arith.addf %510, %514 : vector<16x2xf32>
      %c90 = arith.constant 90 : index
      %516 = memref.load %arg1[%c90] : memref<98xf32, #tpu.memory_space<smem>>
      %517 = vector.extract_strided_slice %485 {offsets = [6, 0], sizes = [16, 2], strides = [1, 1]} : vector<22x2xf32> to vector<16x2xf32>
      %518 = vector.broadcast %516 : f32 to vector<16x2xf32>
      %519 = arith.mulf %518, %517 : vector<16x2xf32>
      %520 = arith.addf %515, %519 : vector<16x2xf32>
      %c6_i32_74 = arith.constant 6 : i32
      %521 = arith.addi %13, %c6_i32_74 : i32
      %c1_75 = arith.constant 1 : index
      %522 = arith.index_cast %521 : i32 to index
      %c0_76 = arith.constant 0 : index
      %c0_77 = arith.constant 0 : index
      %523 = vector.load %arg5[%c1_75, %522, %c0_76, %c0_77] : memref<2x22x22x2xf32, #tpu.memory_space<vmem>>, vector<1x1x22x2xf32>
      %524 = vector.shape_cast %523 : vector<1x1x22x2xf32> to vector<22x2xf32>
      %c91 = arith.constant 91 : index
      %525 = memref.load %arg1[%c91] : memref<98xf32, #tpu.memory_space<smem>>
      %526 = vector.extract_strided_slice %524 {offsets = [0, 0], sizes = [16, 2], strides = [1, 1]} : vector<22x2xf32> to vector<16x2xf32>
      %527 = vector.broadcast %525 : f32 to vector<16x2xf32>
      %528 = arith.mulf %527, %526 : vector<16x2xf32>
      %529 = arith.addf %520, %528 : vector<16x2xf32>
      %c92 = arith.constant 92 : index
      %530 = memref.load %arg1[%c92] : memref<98xf32, #tpu.memory_space<smem>>
      %531 = vector.extract_strided_slice %524 {offsets = [1, 0], sizes = [16, 2], strides = [1, 1]} : vector<22x2xf32> to vector<16x2xf32>
      %532 = vector.broadcast %530 : f32 to vector<16x2xf32>
      %533 = arith.mulf %532, %531 : vector<16x2xf32>
      %534 = arith.addf %529, %533 : vector<16x2xf32>
      %c93 = arith.constant 93 : index
      %535 = memref.load %arg1[%c93] : memref<98xf32, #tpu.memory_space<smem>>
      %536 = vector.extract_strided_slice %524 {offsets = [2, 0], sizes = [16, 2], strides = [1, 1]} : vector<22x2xf32> to vector<16x2xf32>
      %537 = vector.broadcast %535 : f32 to vector<16x2xf32>
      %538 = arith.mulf %537, %536 : vector<16x2xf32>
      %539 = arith.addf %534, %538 : vector<16x2xf32>
      %c94 = arith.constant 94 : index
      %540 = memref.load %arg1[%c94] : memref<98xf32, #tpu.memory_space<smem>>
      %541 = vector.extract_strided_slice %524 {offsets = [3, 0], sizes = [16, 2], strides = [1, 1]} : vector<22x2xf32> to vector<16x2xf32>
      %542 = vector.broadcast %540 : f32 to vector<16x2xf32>
      %543 = arith.mulf %542, %541 : vector<16x2xf32>
      %544 = arith.addf %539, %543 : vector<16x2xf32>
      %c95 = arith.constant 95 : index
      %545 = memref.load %arg1[%c95] : memref<98xf32, #tpu.memory_space<smem>>
      %546 = vector.extract_strided_slice %524 {offsets = [4, 0], sizes = [16, 2], strides = [1, 1]} : vector<22x2xf32> to vector<16x2xf32>
      %547 = vector.broadcast %545 : f32 to vector<16x2xf32>
      %548 = arith.mulf %547, %546 : vector<16x2xf32>
      %549 = arith.addf %544, %548 : vector<16x2xf32>
      %c96 = arith.constant 96 : index
      %550 = memref.load %arg1[%c96] : memref<98xf32, #tpu.memory_space<smem>>
      %551 = vector.extract_strided_slice %524 {offsets = [5, 0], sizes = [16, 2], strides = [1, 1]} : vector<22x2xf32> to vector<16x2xf32>
      %552 = vector.broadcast %550 : f32 to vector<16x2xf32>
      %553 = arith.mulf %552, %551 : vector<16x2xf32>
      %554 = arith.addf %549, %553 : vector<16x2xf32>
      %c97 = arith.constant 97 : index
      %555 = memref.load %arg1[%c97] : memref<98xf32, #tpu.memory_space<smem>>
      %556 = vector.extract_strided_slice %524 {offsets = [6, 0], sizes = [16, 2], strides = [1, 1]} : vector<22x2xf32> to vector<16x2xf32>
      %557 = vector.broadcast %555 : f32 to vector<16x2xf32>
      %558 = arith.mulf %557, %556 : vector<16x2xf32>
      %559 = arith.addf %554, %558 : vector<16x2xf32>
      %560 = arith.negf %559 : vector<16x2xf32>
      %561 = math.exp %560 : vector<16x2xf32>
      %cst_78 = arith.constant 1.000000e+00 : f32
      %562 = vector.broadcast %cst_78 : f32 to vector<16x2xf32>
      %563 = arith.addf %562, %561 : vector<16x2xf32>
      %564 = arith.divf %562, %563 : vector<16x2xf32>
      %c0_79 = arith.constant 0 : index
      %565 = arith.index_cast %13 : i32 to index
      %c0_80 = arith.constant 0 : index
      %c0_81 = arith.constant 0 : index
      %566 = vector.load %arg3[%c0_79, %565, %c0_80, %c0_81] : memref<4x16x16x2xf32, #tpu.memory_space<vmem>>, vector<1x1x16x2xf32>
      %567 = vector.shape_cast %566 : vector<1x1x16x2xf32> to vector<16x2xf32>
      %568 = arith.mulf %567, %564 : vector<16x2xf32>
      %c0_82 = arith.constant 0 : index
      %569 = arith.index_cast %13 : i32 to index
      %c0_83 = arith.constant 0 : index
      %c0_84 = arith.constant 0 : index
      %570 = vector.load %arg4[%c0_82, %569, %c0_83, %c0_84] : memref<4x16x16x2xf32, #tpu.memory_space<vmem>>, vector<1x1x16x2xf32>
      %571 = vector.shape_cast %570 : vector<1x1x16x2xf32> to vector<16x2xf32>
      %572 = vector.shape_cast %568 : vector<16x2xf32> to vector<1x1x16x2xf32>
      tpu.vector_store %arg4[%c0_82, %569, %c0_83, %c0_84], %572 {strides = array<i32>} : memref<4x16x16x2xf32, #tpu.memory_space<vmem>>, vector<1x1x16x2xf32>,
      %c1_85 = arith.constant 1 : index
      %573 = arith.index_cast %13 : i32 to index
      %c0_86 = arith.constant 0 : index
      %c0_87 = arith.constant 0 : index
      %574 = vector.load %arg3[%c1_85, %573, %c0_86, %c0_87] : memref<4x16x16x2xf32, #tpu.memory_space<vmem>>, vector<1x1x16x2xf32>
      %575 = vector.shape_cast %574 : vector<1x1x16x2xf32> to vector<16x2xf32>
      %576 = arith.mulf %575, %564 : vector<16x2xf32>
      %c1_88 = arith.constant 1 : index
      %577 = arith.index_cast %13 : i32 to index
      %c0_89 = arith.constant 0 : index
      %c0_90 = arith.constant 0 : index
      %578 = vector.load %arg4[%c1_88, %577, %c0_89, %c0_90] : memref<4x16x16x2xf32, #tpu.memory_space<vmem>>, vector<1x1x16x2xf32>
      %579 = vector.shape_cast %578 : vector<1x1x16x2xf32> to vector<16x2xf32>
      %580 = vector.shape_cast %576 : vector<16x2xf32> to vector<1x1x16x2xf32>
      tpu.vector_store %arg4[%c1_88, %577, %c0_89, %c0_90], %580 {strides = array<i32>} : memref<4x16x16x2xf32, #tpu.memory_space<vmem>>, vector<1x1x16x2xf32>,
      %c2_91 = arith.constant 2 : index
      %581 = arith.index_cast %13 : i32 to index
      %c0_92 = arith.constant 0 : index
      %c0_93 = arith.constant 0 : index
      %582 = vector.load %arg3[%c2_91, %581, %c0_92, %c0_93] : memref<4x16x16x2xf32, #tpu.memory_space<vmem>>, vector<1x1x16x2xf32>
      %583 = vector.shape_cast %582 : vector<1x1x16x2xf32> to vector<16x2xf32>
      %584 = arith.mulf %583, %564 : vector<16x2xf32>
      %c2_94 = arith.constant 2 : index
      %585 = arith.index_cast %13 : i32 to index
      %c0_95 = arith.constant 0 : index
      %c0_96 = arith.constant 0 : index
      %586 = vector.load %arg4[%c2_94, %585, %c0_95, %c0_96] : memref<4x16x16x2xf32, #tpu.memory_space<vmem>>, vector<1x1x16x2xf32>
      %587 = vector.shape_cast %586 : vector<1x1x16x2xf32> to vector<16x2xf32>
      %588 = vector.shape_cast %584 : vector<16x2xf32> to vector<1x1x16x2xf32>
      tpu.vector_store %arg4[%c2_94, %585, %c0_95, %c0_96], %588 {strides = array<i32>} : memref<4x16x16x2xf32, #tpu.memory_space<vmem>>, vector<1x1x16x2xf32>,
      %c3_97 = arith.constant 3 : index
      %589 = arith.index_cast %13 : i32 to index
      %c0_98 = arith.constant 0 : index
      %c0_99 = arith.constant 0 : index
      %590 = vector.load %arg3[%c3_97, %589, %c0_98, %c0_99] : memref<4x16x16x2xf32, #tpu.memory_space<vmem>>, vector<1x1x16x2xf32>
      %591 = vector.shape_cast %590 : vector<1x1x16x2xf32> to vector<16x2xf32>
      %592 = arith.mulf %591, %564 : vector<16x2xf32>
      %c3_100 = arith.constant 3 : index
      %593 = arith.index_cast %13 : i32 to index
      %c0_101 = arith.constant 0 : index
      %c0_102 = arith.constant 0 : index
      %594 = vector.load %arg4[%c3_100, %593, %c0_101, %c0_102] : memref<4x16x16x2xf32, #tpu.memory_space<vmem>>, vector<1x1x16x2xf32>
      %595 = vector.shape_cast %594 : vector<1x1x16x2xf32> to vector<16x2xf32>
      %596 = vector.shape_cast %592 : vector<16x2xf32> to vector<1x1x16x2xf32>
      tpu.vector_store %arg4[%c3_100, %593, %c0_101, %c0_102], %596 {strides = array<i32>} : memref<4x16x16x2xf32, #tpu.memory_space<vmem>>, vector<1x1x16x2xf32>,
    }
    %c16_i32_21 = arith.constant 16 : i32
    return
  }
  func.func @transform_0(%arg0: i32) -> i32 {
    %c0_i32 = arith.constant 0 : i32
    %c0_i32_0 = arith.constant 0 : i32
    return %c0_i32 : i32
  }
  func.func @transform_1(%arg0: i32) -> i32 {
    %c0_i32 = arith.constant 0 : i32
    %c0_i32_0 = arith.constant 0 : i32
    return %c0_i32 : i32
  }
  func.func @transform_2(%arg0: i32) -> (i32, i32, i32, i32) {
    %c0_i32 = arith.constant 0 : i32
    %c0_i32_0 = arith.constant 0 : i32
    %c0_i32_1 = arith.constant 0 : i32
    %c0_i32_2 = arith.constant 0 : i32
    return %c0_i32, %c0_i32_0, %c0_i32_1, %arg0 : i32, i32, i32, i32
  }
  func.func @transform_3(%arg0: i32) -> (i32, i32, i32, i32) {
    %c0_i32 = arith.constant 0 : i32
    %c0_i32_0 = arith.constant 0 : i32
    %c0_i32_1 = arith.constant 0 : i32
    %c0_i32_2 = arith.constant 0 : i32
    return %c0_i32, %c0_i32_0, %c0_i32_1, %arg0 : i32, i32, i32, i32
  }
}

</mosaic_0001>

<llo_original>
// kernel: spatial_attention.1
$region0: #{spatial_attention.1}
  #allocation0 [shape = 'u32[]', space=smem, size = 0x4, offset = 0x4, fixed_abs, tag = 'smem constant byte address 0x4 - core index']
  #allocation1 [shape = 'u32[144,128]{1,0:T(1,128)}', space=vmem, size = 0x12000, scoped, tag = 'internal scratch']
  #allocation2 [shape = 'f32[2,22,22,2]{3,2,1,0:T(8,128)}', space=vmem, size = 0x84000, scoped, tag = 'scratch operand']
  #allocation3 [shape = 'f32[1]{0:T(128)S(6)}', space=smem, size = 0x200, scoped, tag = 'scoped memory for spatial_attention.1']
  %s0 = inlined_call_operand.vmem [shape: f32[98], index: 0, kind: input, shape index: {}]
  %s1 = inlined_call_operand.<no memory space> [shape: f32[1], index: 1, kind: input, shape index: {}]
  %s2 = inlined_call_operand.vmem [shape: f32[4,16,16,2], index: 2, kind: input, shape index: {}]
  %s3 = inlined_call_operand.vmem [shape: f32[4,16,16,2], index: 3, kind: output, shape index: {}]
  %s4 = sld [smem:[#allocation0]]
  $region40: #{spatial_attention.1} parent=0
    _
  %s6 = ssub.s32 1, %s4
  %s7 = scalar_select 0, %s6, %s4
  %8 = sst [smem:[#allocation3]] %s1
  $region1: #{spatial_attention.1} parent=0
    #allocation4 [shape = 'u8[512]{0}', space=smem, size = 0x200, scoped, tag = 'input window, operand 0, single buffered']
    #allocation5 [shape = 's32[1]{0}', space=sflag, size = 0x4, scoped, tag = 'scoped memory for spatial_attention.1']
    %9 = vsyncpa [#allocation5], 0
    // Predicated region
    $region2: #{spatial_attention.1} parent=1 // pred_check
      _
    $region3: #{spatial_attention.1} parent=1 // pred_check_branch
      %11 = sbr.rel (0) target = $region5
    $region4: #{spatial_attention.1} parent=1 // pred_region
      %s13 = ssub.s32 16, 16
      %14 = vsyncadd [#allocation5], %s13
      %s16 = sshll.u32 %s0, 4
      %s17 = int_to_ptr.vmem [resolvable:$true] %s16
      %19 = dma.vmem_to_smem %s17, 16, [#allocation4], [#allocation5]
    $region5: #{spatial_attention.1} parent=1 // pred_fallthru
      _
    // Predicated region
    $region6: #{spatial_attention.1} parent=1 // pred_check
      _
    $region7: #{spatial_attention.1} parent=1 // pred_check_branch
      %21 = sbr.rel (0) target = $region9
    $region8: #{spatial_attention.1} parent=1 // pred_region
      _
    $region9: #{spatial_attention.1} parent=1 // pred_fallthru
      _
    // Predicated region
    $region10: #{spatial_attention.1} parent=1 // pred_check
      _
    $region11: #{spatial_attention.1} parent=1 // pred_check_branch
      %23 = sbr.rel (0) target = $region13
    $region12: #{spatial_attention.1} parent=1 // pred_region
      _
    $region13: #{spatial_attention.1} parent=1 // pred_fallthru
      _
    // Predicated region
    $region14: #{spatial_attention.1} parent=1 // pred_check
      _
    $region15: #{spatial_attention.1} parent=1 // pred_check_branch
      %25 = sbr.rel (0) target = $region17
    $region16: #{spatial_attention.1} parent=1 // pred_region
      %26 = dma.done [#allocation5], 16
    $region17: #{spatial_attention.1} parent=1 // pred_fallthru
      _
    %27 = sfence
    %vm28 = vcmask 15360
    %29 = vst.msk [vmem:[#allocation2] sm:$0xff] %vm28, 0.0
    %30 = vst.msk [vmem:[#allocation2 + $0x8] sm:$0xff] %vm28, 0.0
    %vm31 = vcmask 13312
    %32 = vst.msk [vmem:[#allocation2 + $0x10] sm:$0x3f] %vm31, 0.0
    %33 = vst.msk [vmem:[#allocation2 + $0x18] sm:$0xff] %vm28, 0.0
    %34 = vst.msk [vmem:[#allocation2 + $0x20] sm:$0xff] %vm28, 0.0
    %35 = vst.msk [vmem:[#allocation2 + $0x28] sm:$0x3f] %vm31, 0.0
    %36 = vst.msk [vmem:[#allocation2 + $0x30] sm:$0xff] %vm28, 0.0
    %37 = vst.msk [vmem:[#allocation2 + $0x38] sm:$0xff] %vm28, 0.0
    %38 = vst.msk [vmem:[#allocation2 + $0x40] sm:$0x3f] %vm31, 0.0
    %39 = vst.msk [vmem:[#allocation2 + $0x210] sm:$0xff] %vm28, 0.0
    %40 = vst.msk [vmem:[#allocation2 + $0x218] sm:$0xff] %vm28, 0.0
    %41 = vst.msk [vmem:[#allocation2 + $0x220] sm:$0x3f] %vm31, 0.0
    %42 = vst.msk [vmem:[#allocation2 + $0x228] sm:$0xff] %vm28, 0.0
    %43 = vst.msk [vmem:[#allocation2 + $0x230] sm:$0xff] %vm28, 0.0
    %44 = vst.msk [vmem:[#allocation2 + $0x238] sm:$0x3f] %vm31, 0.0
    %45 = vst.msk [vmem:[#allocation2 + $0x240] sm:$0xff] %vm28, 0.0
    %46 = vst.msk [vmem:[#allocation2 + $0x248] sm:$0xff] %vm28, 0.0
    %47 = vst.msk [vmem:[#allocation2 + $0x250] sm:$0x3f] %vm31, 0.0
    %s48 = scalar_lea.vmem [#allocation2], 456
    %49 = vst.msk [vmem:[%s48] sm:$0xff] %vm28, 0.0
    %50 = vst.msk [vmem:[%s48 + $0x8] sm:$0xff] %vm28, 0.0
    %51 = vst.msk [vmem:[%s48 + $0x10] sm:$0x3f] %vm31, 0.0
    %52 = vst.msk [vmem:[%s48 + $0x18] sm:$0xff] %vm28, 0.0
    %53 = vst.msk [vmem:[%s48 + $0x20] sm:$0xff] %vm28, 0.0
    %54 = vst.msk [vmem:[%s48 + $0x28] sm:$0x3f] %vm31, 0.0
    %55 = vst.msk [vmem:[%s48 + $0x30] sm:$0xff] %vm28, 0.0
    %56 = vst.msk [vmem:[%s48 + $0x38] sm:$0xff] %vm28, 0.0
    %57 = vst.msk [vmem:[%s48 + $0x40] sm:$0x3f] %vm31, 0.0
    %58 = vst.msk [vmem:[%s48 + $0x210] sm:$0xff] %vm28, 0.0
    %59 = vst.msk [vmem:[%s48 + $0x218] sm:$0xff] %vm28, 0.0
    %60 = vst.msk [vmem:[%s48 + $0x220] sm:$0x3f] %vm31, 0.0
    %61 = vst.msk [vmem:[%s48 + $0x228] sm:$0xff] %vm28, 0.0
    %62 = vst.msk [vmem:[%s48 + $0x230] sm:$0xff] %vm28, 0.0
    %63 = vst.msk [vmem:[%s48 + $0x238] sm:$0x3f] %vm31, 0.0
    %64 = vst.msk [vmem:[%s48 + $0x240] sm:$0xff] %vm28, 0.0
    %65 = vst.msk [vmem:[%s48 + $0x248] sm:$0xff] %vm28, 0.0
    %66 = vst.msk [vmem:[%s48 + $0x250] sm:$0x3f] %vm31, 0.0
    %s67 = scalar_lea.vmem [#allocation2], 72
    %vm68 = vcmask 10240
    %69 = vst.msk [vmem:[%s67] sm:$0x7] %vm68, 0.0
    %70 = vst.msk [vmem:[%s67 + $0x18] sm:$0x7] %vm68, 0.0
    %71 = vst.msk [vmem:[%s67 + $0x30] sm:$0x7] %vm68, 0.0
    %72 = vst.msk [vmem:[%s67 + $0x48] sm:$0x7] %vm68, 0.0
    %73 = vst.msk [vmem:[%s67 + $0x60] sm:$0x7] %vm68, 0.0
    %74 = vst.msk [vmem:[%s67 + $0x78] sm:$0x7] %vm68, 0.0
    %75 = vst.msk [vmem:[%s67 + $0x90] sm:$0x7] %vm68, 0.0
    %76 = vst.msk [vmem:[%s67 + $0xa8] sm:$0x7] %vm68, 0.0
    %77 = vst.msk [vmem:[%s67 + $0xc0] sm:$0x7] %vm68, 0.0
    %78 = vst.msk [vmem:[%s67 + $0xd8] sm:$0x7] %vm68, 0.0
    %79 = vst.msk [vmem:[%s67 + $0xf0] sm:$0x7] %vm68, 0.0
    %80 = vst.msk [vmem:[%s67 + $0x108] sm:$0x7] %vm68, 0.0
    %81 = vst.msk [vmem:[%s67 + $0x120] sm:$0x7] %vm68, 0.0
    %82 = vst.msk [vmem:[%s67 + $0x138] sm:$0x7] %vm68, 0.0
    %83 = vst.msk [vmem:[%s67 + $0x150] sm:$0x7] %vm68, 0.0
    %84 = vst.msk [vmem:[%s67 + $0x168] sm:$0x7] %vm68, 0.0
    %85 = vst.msk [vmem:[%s67 + $0x210] sm:$0x7] %vm68, 0.0
    %86 = vst.msk [vmem:[%s67 + $0x228] sm:$0x7] %vm68, 0.0
    %87 = vst.msk [vmem:[%s67 + $0x240] sm:$0x7] %vm68, 0.0
    %88 = vst.msk [vmem:[%s67 + $0x258] sm:$0x7] %vm68, 0.0
    %89 = vst.msk [vmem:[%s67 + $0x270] sm:$0x7] %vm68, 0.0
    %90 = vst.msk [vmem:[%s67 + $0x288] sm:$0x7] %vm68, 0.0
    %91 = vst.msk [vmem:[%s67 + $0x2a0] sm:$0x7] %vm68, 0.0
    %92 = vst.msk [vmem:[%s67 + $0x2b8] sm:$0x7] %vm68, 0.0
    %93 = vst.msk [vmem:[%s67 + $0x2d0] sm:$0x7] %vm68, 0.0
    %94 = vst.msk [vmem:[%s67 + $0x2e8] sm:$0x7] %vm68, 0.0
    %95 = vst.msk [vmem:[%s67 + $0x300] sm:$0x7] %vm68, 0.0
    %96 = vst.msk [vmem:[%s67 + $0x318] sm:$0x7] %vm68, 0.0
    %97 = vst.msk [vmem:[%s67 + $0x330] sm:$0x7] %vm68, 0.0
    %98 = vst.msk [vmem:[%s67 + $0x348] sm:$0x7] %vm68, 0.0
    %99 = vst.msk [vmem:[%s67 + $0x360] sm:$0x7] %vm68, 0.0
    %100 = vst.msk [vmem:[%s67 + $0x378] sm:$0x7] %vm68, 0.0
    %101 = vst.msk [vmem:[%s67 + $0x13] sm:$0x7] %vm68, 0.0
    %102 = vst.msk [vmem:[%s67 + $0x2b] sm:$0x7] %vm68, 0.0
    %103 = vst.msk [vmem:[%s67 + $0x43] sm:$0x7] %vm68, 0.0
    %104 = vst.msk [vmem:[%s67 + $0x5b] sm:$0x7] %vm68, 0.0
    %105 = vst.msk [vmem:[%s67 + $0x73] sm:$0x7] %vm68, 0.0
    %106 = vst.msk [vmem:[%s67 + $0x8b] sm:$0x7] %vm68, 0.0
    %107 = vst.msk [vmem:[%s67 + $0xa3] sm:$0x7] %vm68, 0.0
    %108 = vst.msk [vmem:[%s67 + $0xbb] sm:$0x7] %vm68, 0.0
    %109 = vst.msk [vmem:[%s67 + $0xd3] sm:$0x7] %vm68, 0.0
    %110 = vst.msk [vmem:[%s67 + $0xeb] sm:$0x7] %vm68, 0.0
    %111 = vst.msk [vmem:[%s67 + $0x103] sm:$0x7] %vm68, 0.0
    %112 = vst.msk [vmem:[%s67 + $0x11b] sm:$0x7] %vm68, 0.0
    %113 = vst.msk [vmem:[%s67 + $0x133] sm:$0x7] %vm68, 0.0
    %114 = vst.msk [vmem:[%s67 + $0x14b] sm:$0x7] %vm68, 0.0
    %115 = vst.msk [vmem:[%s67 + $0x163] sm:$0x7] %vm68, 0.0
    %116 = vst.msk [vmem:[%s67 + $0x17b] sm:$0x7] %vm68, 0.0
    %117 = vst.msk [vmem:[%s67 + $0x223] sm:$0x7] %vm68, 0.0
    %118 = vst.msk [vmem:[%s67 + $0x23b] sm:$0x7] %vm68, 0.0
    %119 = vst.msk [vmem:[%s67 + $0x253] sm:$0x7] %vm68, 0.0
    %120 = vst.msk [vmem:[%s67 + $0x26b] sm:$0x7] %vm68, 0.0
    %121 = vst.msk [vmem:[%s67 + $0x283] sm:$0x7] %vm68, 0.0
    %122 = vst.msk [vmem:[%s67 + $0x29b] sm:$0x7] %vm68, 0.0
    %123 = vst.msk [vmem:[%s67 + $0x2b3] sm:$0x7] %vm68, 0.0
    %124 = vst.msk [vmem:[%s67 + $0x2cb] sm:$0x7] %vm68, 0.0
    %125 = vst.msk [vmem:[%s67 + $0x2e3] sm:$0x7] %vm68, 0.0
    %126 = vst.msk [vmem:[%s67 + $0x2fb] sm:$0x7] %vm68, 0.0
    %127 = vst.msk [vmem:[%s67 + $0x313] sm:$0x7] %vm68, 0.0
    %128 = vst.msk [vmem:[%s67 + $0x32b] sm:$0x7] %vm68, 0.0
    %129 = vst.msk [vmem:[%s67 + $0x343] sm:$0x7] %vm68, 0.0
    %130 = vst.msk [vmem:[%s67 + $0x35b] sm:$0x7] %vm68, 0.0
    %131 = vst.msk [vmem:[%s67 + $0x373] sm:$0x7] %vm68, 0.0
    %132 = vst.msk [vmem:[%s67 + $0x38b] sm:$0x7] %vm68, 0.0
    loop: start=0, step=1, limit=16
    $region18: #{spatial_attention.1} parent=1 // loop_pre_header
      _
    $region19: #{spatial_attention.1} parent=1 // loop_header
      %s134 = sphi 0, %s138
      %p135 = scmp.ge.s32.totalorder %s134, 16
    $region20: #{spatial_attention.1} parent=1 // loop_header_branch
      %137 = sbr.rel (%p135) target = $region24
    $region21: #{spatial_attention.1} parent=1 // loop_body
      %s139 = smul.u32 %s134, 16
      %s140 = scalar_lea.vmem %s2, %s139
      %v141 = vld [vmem:[%s140] sm:$0xff]
      %v142 = vld [vmem:[%s140 + $0x8] sm:$0xff]
      %s143 = sadd.s32 %s139, 256
      %s144 = scalar_lea.vmem %s2, %s143
      %v145 = vld [vmem:[%s144] sm:$0xff]
      %v146 = vld [vmem:[%s144 + $0x8] sm:$0xff]
      %v147 = vadd.f32 %v141, %v145
      %v148 = vadd.f32 %v142, %v146
      %v149 = vmax.f32 %v141, %v145
      %v150 = vmax.f32 %v142, %v146
      %s151 = sadd.s32 %s139, 512
      %s152 = scalar_lea.vmem %s2, %s151
      %v153 = vld [vmem:[%s152] sm:$0xff]
      %v154 = vld [vmem:[%s152 + $0x8] sm:$0xff]
      %v155 = vadd.f32 %v147, %v153
      %v156 = vadd.f32 %v148, %v154
      %v157 = vmax.f32 %v149, %v153
      %v158 = vmax.f32 %v150, %v154
      %s159 = sadd.s32 %s139, 768
      %s160 = scalar_lea.vmem %s2, %s159
      %v161 = vld [vmem:[%s160] sm:$0xff]
      %v162 = vld [vmem:[%s160 + $0x8] sm:$0xff]
      %v163 = vadd.f32 %v155, %v161
      %v164 = vadd.f32 %v156, %v162
      %v165 = vmax.f32 %v157, %v161
      %v166 = vmax.f32 %v158, %v162
      %v167 = vmul.f32 %v163, 0.25
      %v168 = vmul.f32 %v164, 0.25
      %s169 = sadd.s32 %s134, 3
      %s170 = smul.u32 %s169, 24
      %s171 = scalar_lea.vmem [#allocation2], %s170
      %172 = vst.msk [vmem:[%s171 + $0x3] sm:$0xff] %vm28, %v167
      %173 = vst.msk [vmem:[%s171 + $0xb] sm:$0xff] %vm28, %v168
      %s174 = sadd.s32 %s170, 528
      %s175 = scalar_lea.vmem [#allocation2], %s174
      %176 = vst.msk [vmem:[%s175 + $0x3] sm:$0xff] %vm28, %v165
      %177 = vst.msk [vmem:[%s175 + $0xb] sm:$0xff] %vm28, %v166
    $region22: #{spatial_attention.1} parent=1 // loop_footer
      %s138 = sadd.s32 1, %s134
    $region23: #{spatial_attention.1} parent=1 // loop_footer_branch
      %133 = sbr.rel target = $region19
    $region24: #{spatial_attention.1} parent=1 // loop_exit
      _
    %s178 = sld [smem:[#allocation3]]
    %v179 = vstv %s178
    loop: start=0, step=1, limit=16
    $region25: #{spatial_attention.1} parent=1 // loop_pre_header
      _
    $region26: #{spatial_attention.1} parent=1 // loop_header
      %s181 = sphi 0, %s185
      %p182 = scmp.ge.s32.totalorder %s181, 16
    $region27: #{spatial_attention.1} parent=1 // loop_header_branch
      %184 = sbr.rel (%p182) target = $region31
    $region28: #{spatial_attention.1} parent=1 // loop_body
      %s186 = smul.u32 %s181, 24
      %s187 = scalar_lea.vmem [#allocation2], %s186
      %v188 = vld [vmem:[%s187] sm:$0xff]
      %v189 = vld [vmem:[%s187 + $0x8] sm:$0xff]
      %v190 = vld [vmem:[%s187 + $0x10] sm:$0x3f]
      %s191 = sld [smem:[#allocation4]]
      %v192 = vstv %s191
      %v193 = vmul.f32 %v192, %v188
      %v194 = vmul.f32 %v192, %v189
      %v195 = vadd.f32 %v179, %v193
      %v196 = vadd.f32 %v179, %v194
      %s197 = sld [smem:[#allocation4 + $0x1]]
      %v198 = vstv %s197
      %v199 = vmul.f32 %v198, %v188
      %v200 = vmul.f32 %v198, %v189
      %v201 = vmul.f32 %v198, %v190
      %vm205 = vcmask 1046528
      %v206 = vrot.slane %v199, 1
      %v207 = vrot.slane %v200, 1
      %v208 = vsel %vm205, %v206, %v207
      %v209 = vrot.slane %v201, 1
      %v210 = vsel %vm205, %v207, %v209
      %v213 = vadd.f32 %v195, %v208
      %v214 = vadd.f32 %v196, %v210
      %s215 = sld [smem:[#allocation4 + $0x2]]
      %v216 = vstv %s215
      %v217 = vmul.f32 %v216, %v188
      %v218 = vmul.f32 %v216, %v189
      %v219 = vmul.f32 %v216, %v190
      %vm223 = vcmask 1045504
      %v224 = vrot.slane %v217, 2
      %v225 = vrot.slane %v218, 2
      %v226 = vsel %vm223, %v224, %v225
      %v227 = vrot.slane %v219, 2
      %v228 = vsel %vm223, %v225, %v227
      %v231 = vadd.f32 %v213, %v226
      %v232 = vadd.f32 %v214, %v228
      %s233 = sld [smem:[#allocation4 + $0x3]]
      %v234 = vstv %s233
      %v235 = vmul.f32 %v234, %v188
      %v236 = vmul.f32 %v234, %v189
      %v237 = vmul.f32 %v234, %v190
      %vm241 = vcmask 1044480
      %v242 = vrot.slane %v235, 3
      %v243 = vrot.slane %v236, 3
      %v244 = vsel %vm241, %v242, %v243
      %v245 = vrot.slane %v237, 3
      %v246 = vsel %vm241, %v243, %v245
      %v249 = vadd.f32 %v231, %v244
      %v250 = vadd.f32 %v232, %v246
      %s251 = sld [smem:[#allocation4 + $0x4]]
      %v252 = vstv %s251
      %v253 = vmul.f32 %v252, %v188
      %v254 = vmul.f32 %v252, %v189
      %v255 = vmul.f32 %v252, %v190
      %vm259 = vcmask 1043456
      %v260 = vrot.slane %v253, 4
      %v261 = vrot.slane %v254, 4
      %v262 = vsel %vm259, %v260, %v261
      %v263 = vrot.slane %v255, 4
      %v264 = vsel %vm259, %v261, %v263
      %v267 = vadd.f32 %v249, %v262
      %v268 = vadd.f32 %v250, %v264
      %s269 = sld [smem:[#allocation4 + $0x5]]
      %v270 = vstv %s269
      %v271 = vmul.f32 %v270, %v188
      %v272 = vmul.f32 %v270, %v189
      %v273 = vmul.f32 %v270, %v190
      %vm277 = vcmask 1042432
      %v278 = vrot.slane %v271, 5
      %v279 = vrot.slane %v272, 5
      %v280 = vsel %vm277, %v278, %v279
      %v281 = vrot.slane %v273, 5
      %v282 = vsel %vm277, %v279, %v281
      %v285 = vadd.f32 %v267, %v280
      %v286 = vadd.f32 %v268, %v282
      %s287 = sld [smem:[#allocation4 + $0x6]]
      %v288 = vstv %s287
      %v289 = vmul.f32 %v288, %v188
      %v290 = vmul.f32 %v288, %v189
      %v291 = vmul.f32 %v288, %v190
      %vm295 = vcmask 1041408
      %v296 = vrot.slane %v289, 6
      %v297 = vrot.slane %v290, 6
      %v298 = vsel %vm295, %v296, %v297
      %v299 = vrot.slane %v291, 6
      %v300 = vsel %vm295, %v297, %v299
      %v303 = vadd.f32 %v285, %v298
      %v304 = vadd.f32 %v286, %v300
      %s305 = sadd.s32 %s181, 1
      %s306 = smul.u32 %s305, 24
      %s307 = scalar_lea.vmem [#allocation2], %s306
      %v308 = vld [vmem:[%s307] sm:$0xff]
      %v309 = vld [vmem:[%s307 + $0x8] sm:$0xff]
      %v310 = vld [vmem:[%s307 + $0x10] sm:$0x3f]
      %s311 = sld [smem:[#allocation4 + $0x7]]
      %v312 = vstv %s311
      %v313 = vmul.f32 %v312, %v308
      %v314 = vmul.f32 %v312, %v309
      %v315 = vadd.f32 %v303, %v313
      %v316 = vadd.f32 %v304, %v314
      %s317 = sld [smem:[#allocation4 + $0x8]]
      %v318 = vstv %s317
      %v319 = vmul.f32 %v318, %v308
      %v320 = vmul.f32 %v318, %v309
      %v321 = vmul.f32 %v318, %v310
      %v325 = vrot.slane %v319, 1
      %v326 = vrot.slane %v320, 1
      %v327 = vsel %vm205, %v325, %v326
      %v328 = vrot.slane %v321, 1
      %v329 = vsel %vm205, %v326, %v328
      %v332 = vadd.f32 %v315, %v327
      %v333 = vadd.f32 %v316, %v329
      %s334 = sld [smem:[#allocation4 + $0x9]]
      %v335 = vstv %s334
      %v336 = vmul.f32 %v335, %v308
      %v337 = vmul.f32 %v335, %v309
      %v338 = vmul.f32 %v335, %v310
      %v342 = vrot.slane %v336, 2
      %v343 = vrot.slane %v337, 2
      %v344 = vsel %vm223, %v342, %v343
      %v345 = vrot.slane %v338, 2
      %v346 = vsel %vm223, %v343, %v345
      %v349 = vadd.f32 %v332, %v344
      %v350 = vadd.f32 %v333, %v346
      %s351 = sld [smem:[#allocation4 + $0xa]]
      %v352 = vstv %s351
      %v353 = vmul.f32 %v352, %v308
      %v354 = vmul.f32 %v352, %v309
      %v355 = vmul.f32 %v352, %v310
      %v359 = vrot.slane %v353, 3
      %v360 = vrot.slane %v354, 3
      %v361 = vsel %vm241, %v359, %v360
      %v362 = vrot.slane %v355, 3
      %v363 = vsel %vm241, %v360, %v362
      %v366 = vadd.f32 %v349, %v361
      %v367 = vadd.f32 %v350, %v363
      %s368 = sld [smem:[#allocation4 + $0xb]]
      %v369 = vstv %s368
      %v370 = vmul.f32 %v369, %v308
      %v371 = vmul.f32 %v369, %v309
      %v372 = vmul.f32 %v369, %v310
      %v376 = vrot.slane %v370, 4
      %v377 = vrot.slane %v371, 4
      %v378 = vsel %vm259, %v376, %v377
      %v379 = vrot.slane %v372, 4
      %v380 = vsel %vm259, %v377, %v379
      %v383 = vadd.f32 %v366, %v378
      %v384 = vadd.f32 %v367, %v380
      %s385 = sld [smem:[#allocation4 + $0xc]]
      %v386 = vstv %s385
      %v387 = vmul.f32 %v386, %v308
      %v388 = vmul.f32 %v386, %v309
      %v389 = vmul.f32 %v386, %v310
      %v393 = vrot.slane %v387, 5
      %v394 = vrot.slane %v388, 5
      %v395 = vsel %vm277, %v393, %v394
      %v396 = vrot.slane %v389, 5
      %v397 = vsel %vm277, %v394, %v396
      %v400 = vadd.f32 %v383, %v395
      %v401 = vadd.f32 %v384, %v397
      %s402 = sld [smem:[#allocation4 + $0xd]]
      %v403 = vstv %s402
      %v404 = vmul.f32 %v403, %v308
      %v405 = vmul.f32 %v403, %v309
      %v406 = vmul.f32 %v403, %v310
      %v410 = vrot.slane %v404, 6
      %v411 = vrot.slane %v405, 6
      %v412 = vsel %vm295, %v410, %v411
      %v413 = vrot.slane %v406, 6
      %v414 = vsel %vm295, %v411, %v413
      %v417 = vadd.f32 %v400, %v412
      %v418 = vadd.f32 %v401, %v414
      %s419 = sadd.s32 %s181, 2
      %s420 = smul.u32 %s419, 24
      %s421 = scalar_lea.vmem [#allocation2], %s420
      %v422 = vld [vmem:[%s421] sm:$0xff]
      %v423 = vld [vmem:[%s421 + $0x8] sm:$0xff]
      %v424 = vld [vmem:[%s421 + $0x10] sm:$0x3f]
      %s425 = sld [smem:[#allocation4 + $0xe]]
      %v426 = vstv %s425
      %v427 = vmul.f32 %v426, %v422
      %v428 = vmul.f32 %v426, %v423
      %v429 = vadd.f32 %v417, %v427
      %v430 = vadd.f32 %v418, %v428
      %s431 = sld [smem:[#allocation4 + $0xf]]
      %v432 = vstv %s431
      %v433 = vmul.f32 %v432, %v422
      %v434 = vmul.f32 %v432, %v423
      %v435 = vmul.f32 %v432, %v424
      %v439 = vrot.slane %v433, 1
      %v440 = vrot.slane %v434, 1
      %v441 = vsel %vm205, %v439, %v440
      %v442 = vrot.slane %v435, 1
      %v443 = vsel %vm205, %v440, %v442
      %v446 = vadd.f32 %v429, %v441
      %v447 = vadd.f32 %v430, %v443
      %s448 = sld [smem:[#allocation4 + $0x10]]
      %v449 = vstv %s448
      %v450 = vmul.f32 %v449, %v422
      %v451 = vmul.f32 %v449, %v423
      %v452 = vmul.f32 %v449, %v424
      %v456 = vrot.slane %v450, 2
      %v457 = vrot.slane %v451, 2
      %v458 = vsel %vm223, %v456, %v457
      %v459 = vrot.slane %v452, 2
      %v460 = vsel %vm223, %v457, %v459
      %v463 = vadd.f32 %v446, %v458
      %v464 = vadd.f32 %v447, %v460
      %s465 = sld [smem:[#allocation4 + $0x11]]
      %v466 = vstv %s465
      %v467 = vmul.f32 %v466, %v422
      %v468 = vmul.f32 %v466, %v423
      %v469 = vmul.f32 %v466, %v424
      %v473 = vrot.slane %v467, 3
      %v474 = vrot.slane %v468, 3
      %v475 = vsel %vm241, %v473, %v474
      %v476 = vrot.slane %v469, 3
      %v477 = vsel %vm241, %v474, %v476
      %v480 = vadd.f32 %v463, %v475
      %v481 = vadd.f32 %v464, %v477
      %s482 = sld [smem:[#allocation4 + $0x12]]
      %v483 = vstv %s482
      %v484 = vmul.f32 %v483, %v422
      %v485 = vmul.f32 %v483, %v423
      %v486 = vmul.f32 %v483, %v424
      %v490 = vrot.slane %v484, 4
      %v491 = vrot.slane %v485, 4
      %v492 = vsel %vm259, %v490, %v491
      %v493 = vrot.slane %v486, 4
      %v494 = vsel %vm259, %v491, %v493
      %v497 = vadd.f32 %v480, %v492
      %v498 = vadd.f32 %v481, %v494
      %s499 = sld [smem:[#allocation4 + $0x13]]
      %v500 = vstv %s499
      %v501 = vmul.f32 %v500, %v422
      %v502 = vmul.f32 %v500, %v423
      %v503 = vmul.f32 %v500, %v424
      %v507 = vrot.slane %v501, 5
      %v508 = vrot.slane %v502, 5
      %v509 = vsel %vm277, %v507, %v508
      %v510 = vrot.slane %v503, 5
      %v511 = vsel %vm277, %v508, %v510
      %v514 = vadd.f32 %v497, %v509
      %v515 = vadd.f32 %v498, %v511
      %s516 = sld [smem:[#allocation4 + $0x14]]
      %v517 = vstv %s516
      %v518 = vmul.f32 %v517, %v422
      %v519 = vmul.f32 %v517, %v423
      %v520 = vmul.f32 %v517, %v424
      %v524 = vrot.slane %v518, 6
      %v525 = vrot.slane %v519, 6
      %v526 = vsel %vm295, %v524, %v525
      %v527 = vrot.slane %v520, 6
      %v528 = vsel %vm295, %v525, %v527
      %v531 = vadd.f32 %v514, %v526
      %v532 = vadd.f32 %v515, %v528
      %s533 = sadd.s32 %s181, 3
      %s534 = smul.u32 %s533, 24
      %s535 = scalar_lea.vmem [#allocation2], %s534
      %v536 = vld [vmem:[%s535] sm:$0xff]
      %v537 = vld [vmem:[%s535 + $0x8] sm:$0xff]
      %v538 = vld [vmem:[%s535 + $0x10] sm:$0x3f]
      %s539 = sld [smem:[#allocation4 + $0x15]]
      %v540 = vstv %s539
      %v541 = vmul.f32 %v540, %v536
      %v542 = vmul.f32 %v540, %v537
      %v543 = vadd.f32 %v531, %v541
      %v544 = vadd.f32 %v532, %v542
      %s545 = sld [smem:[#allocation4 + $0x16]]
      %v546 = vstv %s545
      %v547 = vmul.f32 %v546, %v536
      %v548 = vmul.f32 %v546, %v537
      %v549 = vmul.f32 %v546, %v538
      %v553 = vrot.slane %v547, 1
      %v554 = vrot.slane %v548, 1
      %v555 = vsel %vm205, %v553, %v554
      %v556 = vrot.slane %v549, 1
      %v557 = vsel %vm205, %v554, %v556
      %v560 = vadd.f32 %v543, %v555
      %v561 = vadd.f32 %v544, %v557
      %s562 = sld [smem:[#allocation4 + $0x17]]
      %v563 = vstv %s562
      %v564 = vmul.f32 %v563, %v536
      %v565 = vmul.f32 %v563, %v537
      %v566 = vmul.f32 %v563, %v538
      %v570 = vrot.slane %v564, 2
      %v571 = vrot.slane %v565, 2
      %v572 = vsel %vm223, %v570, %v571
      %v573 = vrot.slane %v566, 2
      %v574 = vsel %vm223, %v571, %v573
      %v577 = vadd.f32 %v560, %v572
      %v578 = vadd.f32 %v561, %v574
      %s579 = sld [smem:[#allocation4 + $0x18]]
      %v580 = vstv %s579
      %v581 = vmul.f32 %v580, %v536
      %v582 = vmul.f32 %v580, %v537
      %v583 = vmul.f32 %v580, %v538
      %v587 = vrot.slane %v581, 3
      %v588 = vrot.slane %v582, 3
      %v589 = vsel %vm241, %v587, %v588
      %v590 = vrot.slane %v583, 3
      %v591 = vsel %vm241, %v588, %v590
      %v594 = vadd.f32 %v577, %v589
      %v595 = vadd.f32 %v578, %v591
      %s596 = sld [smem:[#allocation4 + $0x19]]
      %v597 = vstv %s596
      %v598 = vmul.f32 %v597, %v536
      %v599 = vmul.f32 %v597, %v537
      %v600 = vmul.f32 %v597, %v538
      %v604 = vrot.slane %v598, 4
      %v605 = vrot.slane %v599, 4
      %v606 = vsel %vm259, %v604, %v605
      %v607 = vrot.slane %v600, 4
      %v608 = vsel %vm259, %v605, %v607
      %v611 = vadd.f32 %v594, %v606
      %v612 = vadd.f32 %v595, %v608
      %s613 = sld [smem:[#allocation4 + $0x1a]]
      %v614 = vstv %s613
      %v615 = vmul.f32 %v614, %v536
      %v616 = vmul.f32 %v614, %v537
      %v617 = vmul.f32 %v614, %v538
      %v621 = vrot.slane %v615, 5
      %v622 = vrot.slane %v616, 5
      %v623 = vsel %vm277, %v621, %v622
      %v624 = vrot.slane %v617, 5
      %v625 = vsel %vm277, %v622, %v624
      %v628 = vadd.f32 %v611, %v623
      %v629 = vadd.f32 %v612, %v625
      %s630 = sld [smem:[#allocation4 + $0x1b]]
      %v631 = vstv %s630
      %v632 = vmul.f32 %v631, %v536
      %v633 = vmul.f32 %v631, %v537
      %v634 = vmul.f32 %v631, %v538
      %v638 = vrot.slane %v632, 6
      %v639 = vrot.slane %v633, 6
      %v640 = vsel %vm295, %v638, %v639
      %v641 = vrot.slane %v634, 6
      %v642 = vsel %vm295, %v639, %v641
      %v645 = vadd.f32 %v628, %v640
      %v646 = vadd.f32 %v629, %v642
      %s647 = sadd.s32 %s181, 4
      %s648 = smul.u32 %s647, 24
      %s649 = scalar_lea.vmem [#allocation2], %s648
      %v650 = vld [vmem:[%s649] sm:$0xff]
      %v651 = vld [vmem:[%s649 + $0x8] sm:$0xff]
      %v652 = vld [vmem:[%s649 + $0x10] sm:$0x3f]
      %s653 = sld [smem:[#allocation4 + $0x1c]]
      %v654 = vstv %s653
      %v655 = vmul.f32 %v654, %v650
      %v656 = vmul.f32 %v654, %v651
      %v657 = vadd.f32 %v645, %v655
      %v658 = vadd.f32 %v646, %v656
      %s659 = sld [smem:[#allocation4 + $0x1d]]
      %v660 = vstv %s659
      %v661 = vmul.f32 %v660, %v650
      %v662 = vmul.f32 %v660, %v651
      %v663 = vmul.f32 %v660, %v652
      %v667 = vrot.slane %v661, 1
      %v668 = vrot.slane %v662, 1
      %v669 = vsel %vm205, %v667, %v668
      %v670 = vrot.slane %v663, 1
      %v671 = vsel %vm205, %v668, %v670
      %v674 = vadd.f32 %v657, %v669
      %v675 = vadd.f32 %v658, %v671
      %s676 = sld [smem:[#allocation4 + $0x1e]]
      %v677 = vstv %s676
      %v678 = vmul.f32 %v677, %v650
      %v679 = vmul.f32 %v677, %v651
      %v680 = vmul.f32 %v677, %v652
      %v684 = vrot.slane %v678, 2
      %v685 = vrot.slane %v679, 2
      %v686 = vsel %vm223, %v684, %v685
      %v687 = vrot.slane %v680, 2
      %v688 = vsel %vm223, %v685, %v687
      %v691 = vadd.f32 %v674, %v686
      %v692 = vadd.f32 %v675, %v688
      %s693 = sld [smem:[#allocation4 + $0x1f]]
      %v694 = vstv %s693
      %v695 = vmul.f32 %v694, %v650
      %v696 = vmul.f32 %v694, %v651
      %v697 = vmul.f32 %v694, %v652
      %v701 = vrot.slane %v695, 3
      %v702 = vrot.slane %v696, 3
      %v703 = vsel %vm241, %v701, %v702
      %v704 = vrot.slane %v697, 3
      %v705 = vsel %vm241, %v702, %v704
      %v708 = vadd.f32 %v691, %v703
      %v709 = vadd.f32 %v692, %v705
      %s710 = sld [smem:[#allocation4 + $0x20]]
      %v711 = vstv %s710
      %v712 = vmul.f32 %v711, %v650
      %v713 = vmul.f32 %v711, %v651
      %v714 = vmul.f32 %v711, %v652
      %v718 = vrot.slane %v712, 4
      %v719 = vrot.slane %v713, 4
      %v720 = vsel %vm259, %v718, %v719
      %v721 = vrot.slane %v714, 4
      %v722 = vsel %vm259, %v719, %v721
      %v725 = vadd.f32 %v708, %v720
      %v726 = vadd.f32 %v709, %v722
      %s727 = sld [smem:[#allocation4 + $0x21]]
      %v728 = vstv %s727
      %v729 = vmul.f32 %v728, %v650
      %v730 = vmul.f32 %v728, %v651
      %v731 = vmul.f32 %v728, %v652
      %v735 = vrot.slane %v729, 5
      %v736 = vrot.slane %v730, 5
      %v737 = vsel %vm277, %v735, %v736
      %v738 = vrot.slane %v731, 5
      %v739 = vsel %vm277, %v736, %v738
      %v742 = vadd.f32 %v725, %v737
      %v743 = vadd.f32 %v726, %v739
      %s744 = sld [smem:[#allocation4 + $0x22]]
      %v745 = vstv %s744
      %v746 = vmul.f32 %v745, %v650
      %v747 = vmul.f32 %v745, %v651
      %v748 = vmul.f32 %v745, %v652
      %v752 = vrot.slane %v746, 6
      %v753 = vrot.slane %v747, 6
      %v754 = vsel %vm295, %v752, %v753
      %v755 = vrot.slane %v748, 6
      %v756 = vsel %vm295, %v753, %v755
      %v759 = vadd.f32 %v742, %v754
      %v760 = vadd.f32 %v743, %v756
      %s761 = sadd.s32 %s181, 5
      %s762 = smul.u32 %s761, 24
      %s763 = scalar_lea.vmem [#allocation2], %s762
      %v764 = vld [vmem:[%s763] sm:$0xff]
      %v765 = vld [vmem:[%s763 + $0x8] sm:$0xff]
      %v766 = vld [vmem:[%s763 + $0x10] sm:$0x3f]
      %s767 = sld [smem:[#allocation4 + $0x23]]
      %v768 = vstv %s767
      %v769 = vmul.f32 %v768, %v764
      %v770 = vmul.f32 %v768, %v765
      %v771 = vadd.f32 %v759, %v769
      %v772 = vadd.f32 %v760, %v770
      %s773 = sld [smem:[#allocation4 + $0x24]]
      %v774 = vstv %s773
      %v775 = vmul.f32 %v774, %v764
      %v776 = vmul.f32 %v774, %v765
      %v777 = vmul.f32 %v774, %v766
      %v781 = vrot.slane %v775, 1
      %v782 = vrot.slane %v776, 1
      %v783 = vsel %vm205, %v781, %v782
      %v784 = vrot.slane %v777, 1
      %v785 = vsel %vm205, %v782, %v784
      %v788 = vadd.f32 %v771, %v783
      %v789 = vadd.f32 %v772, %v785
      %s790 = sld [smem:[#allocation4 + $0x25]]
      %v791 = vstv %s790
      %v792 = vmul.f32 %v791, %v764
      %v793 = vmul.f32 %v791, %v765
      %v794 = vmul.f32 %v791, %v766
      %v798 = vrot.slane %v792, 2
      %v799 = vrot.slane %v793, 2
      %v800 = vsel %vm223, %v798, %v799
      %v801 = vrot.slane %v794, 2
      %v802 = vsel %vm223, %v799, %v801
      %v805 = vadd.f32 %v788, %v800
      %v806 = vadd.f32 %v789, %v802
      %s807 = sld [smem:[#allocation4 + $0x26]]
      %v808 = vstv %s807
      %v809 = vmul.f32 %v808, %v764
      %v810 = vmul.f32 %v808, %v765
      %v811 = vmul.f32 %v808, %v766
      %v815 = vrot.slane %v809, 3
      %v816 = vrot.slane %v810, 3
      %v817 = vsel %vm241, %v815, %v816
      %v818 = vrot.slane %v811, 3
      %v819 = vsel %vm241, %v816, %v818
      %v822 = vadd.f32 %v805, %v817
      %v823 = vadd.f32 %v806, %v819
      %s824 = sld [smem:[#allocation4 + $0x27]]
      %v825 = vstv %s824
      %v826 = vmul.f32 %v825, %v764
      %v827 = vmul.f32 %v825, %v765
      %v828 = vmul.f32 %v825, %v766
      %v832 = vrot.slane %v826, 4
      %v833 = vrot.slane %v827, 4
      %v834 = vsel %vm259, %v832, %v833
      %v835 = vrot.slane %v828, 4
      %v836 = vsel %vm259, %v833, %v835
      %v839 = vadd.f32 %v822, %v834
      %v840 = vadd.f32 %v823, %v836
      %s841 = sld [smem:[#allocation4 + $0x28]]
      %v842 = vstv %s841
      %v843 = vmul.f32 %v842, %v764
      %v844 = vmul.f32 %v842, %v765
      %v845 = vmul.f32 %v842, %v766
      %v849 = vrot.slane %v843, 5
      %v850 = vrot.slane %v844, 5
      %v851 = vsel %vm277, %v849, %v850
      %v852 = vrot.slane %v845, 5
      %v853 = vsel %vm277, %v850, %v852
      %v856 = vadd.f32 %v839, %v851
      %v857 = vadd.f32 %v840, %v853
      %s858 = sld [smem:[#allocation4 + $0x29]]
      %v859 = vstv %s858
      %v860 = vmul.f32 %v859, %v764
      %v861 = vmul.f32 %v859, %v765
      %v862 = vmul.f32 %v859, %v766
      %v866 = vrot.slane %v860, 6
      %v867 = vrot.slane %v861, 6
      %v868 = vsel %vm295, %v866, %v867
      %v869 = vrot.slane %v862, 6
      %v870 = vsel %vm295, %v867, %v869
      %v873 = vadd.f32 %v856, %v868
      %v874 = vadd.f32 %v857, %v870
      %s875 = sadd.s32 %s181, 6
      %s876 = smul.u32 %s875, 24
      %s877 = scalar_lea.vmem [#allocation2], %s876
      %v878 = vld [vmem:[%s877] sm:$0xff]
      %v879 = vld [vmem:[%s877 + $0x8] sm:$0xff]
      %v880 = vld [vmem:[%s877 + $0x10] sm:$0x3f]
      %s881 = sld [smem:[#allocation4 + $0x2a]]
      %v882 = vstv %s881
      %v883 = vmul.f32 %v882, %v878
      %v884 = vmul.f32 %v882, %v879
      %v885 = vadd.f32 %v873, %v883
      %v886 = vadd.f32 %v874, %v884
      %s887 = sld [smem:[#allocation4 + $0x2b]]
      %v888 = vstv %s887
      %v889 = vmul.f32 %v888, %v878
      %v890 = vmul.f32 %v888, %v879
      %v891 = vmul.f32 %v888, %v880
      %v895 = vrot.slane %v889, 1
      %v896 = vrot.slane %v890, 1
      %v897 = vsel %vm205, %v895, %v896
      %v898 = vrot.slane %v891, 1
      %v899 = vsel %vm205, %v896, %v898
      %v902 = vadd.f32 %v885, %v897
      %v903 = vadd.f32 %v886, %v899
      %s904 = sld [smem:[#allocation4 + $0x2c]]
      %v905 = vstv %s904
      %v906 = vmul.f32 %v905, %v878
      %v907 = vmul.f32 %v905, %v879
      %v908 = vmul.f32 %v905, %v880
      %v912 = vrot.slane %v906, 2
      %v913 = vrot.slane %v907, 2
      %v914 = vsel %vm223, %v912, %v913
      %v915 = vrot.slane %v908, 2
      %v916 = vsel %vm223, %v913, %v915
      %v919 = vadd.f32 %v902, %v914
      %v920 = vadd.f32 %v903, %v916
      %s921 = sld [smem:[#allocation4 + $0x2d]]
      %v922 = vstv %s921
      %v923 = vmul.f32 %v922, %v878
      %v924 = vmul.f32 %v922, %v879
      %v925 = vmul.f32 %v922, %v880
      %v929 = vrot.slane %v923, 3
      %v930 = vrot.slane %v924, 3
      %v931 = vsel %vm241, %v929, %v930
      %v932 = vrot.slane %v925, 3
      %v933 = vsel %vm241, %v930, %v932
      %v936 = vadd.f32 %v919, %v931
      %v937 = vadd.f32 %v920, %v933
      %s938 = sld [smem:[#allocation4 + $0x2e]]
      %v939 = vstv %s938
      %v940 = vmul.f32 %v939, %v878
      %v941 = vmul.f32 %v939, %v879
      %v942 = vmul.f32 %v939, %v880
      %v946 = vrot.slane %v940, 4
      %v947 = vrot.slane %v941, 4
      %v948 = vsel %vm259, %v946, %v947
      %v949 = vrot.slane %v942, 4
      %v950 = vsel %vm259, %v947, %v949
      %v953 = vadd.f32 %v936, %v948
      %v954 = vadd.f32 %v937, %v950
      %s955 = sld [smem:[#allocation4 + $0x2f]]
      %v956 = vstv %s955
      %v957 = vmul.f32 %v956, %v878
      %v958 = vmul.f32 %v956, %v879
      %v959 = vmul.f32 %v956, %v880
      %v963 = vrot.slane %v957, 5
      %v964 = vrot.slane %v958, 5
      %v965 = vsel %vm277, %v963, %v964
      %v966 = vrot.slane %v959, 5
      %v967 = vsel %vm277, %v964, %v966
      %v970 = vadd.f32 %v953, %v965
      %v971 = vadd.f32 %v954, %v967
      %s972 = sld [smem:[#allocation4 + $0x30]]
      %v973 = vstv %s972
      %v974 = vmul.f32 %v973, %v878
      %v975 = vmul.f32 %v973, %v879
      %v976 = vmul.f32 %v973, %v880
      %v980 = vrot.slane %v974, 6
      %v981 = vrot.slane %v975, 6
      %v982 = vsel %vm295, %v980, %v981
      %v983 = vrot.slane %v976, 6
      %v984 = vsel %vm295, %v981, %v983
      %v987 = vadd.f32 %v970, %v982
      %v988 = vadd.f32 %v971, %v984
      %s989 = sadd.s32 %s186, 528
      %s990 = scalar_lea.vmem [#allocation2], %s989
      %v991 = vld [vmem:[%s990] sm:$0xff]
      %v992 = vld [vmem:[%s990 + $0x8] sm:$0xff]
      %v993 = vld [vmem:[%s990 + $0x10] sm:$0x3f]
      %s994 = sld [smem:[#allocation4 + $0x31]]
      %v995 = vstv %s994
      %v996 = vmul.f32 %v995, %v991
      %v997 = vmul.f32 %v995, %v992
      %v998 = vadd.f32 %v987, %v996
      %v999 = vadd.f32 %v988, %v997
      %s1000 = sld [smem:[#allocation4 + $0x32]]
      %v1001 = vstv %s1000
      %v1002 = vmul.f32 %v1001, %v991
      %v1003 = vmul.f32 %v1001, %v992
      %v1004 = vmul.f32 %v1001, %v993
      %v1008 = vrot.slane %v1002, 1
      %v1009 = vrot.slane %v1003, 1
      %v1010 = vsel %vm205, %v1008, %v1009
      %v1011 = vrot.slane %v1004, 1
      %v1012 = vsel %vm205, %v1009, %v1011
      %v1015 = vadd.f32 %v998, %v1010
      %v1016 = vadd.f32 %v999, %v1012
      %s1017 = sld [smem:[#allocation4 + $0x33]]
      %v1018 = vstv %s1017
      %v1019 = vmul.f32 %v1018, %v991
      %v1020 = vmul.f32 %v1018, %v992
      %v1021 = vmul.f32 %v1018, %v993
      %v1025 = vrot.slane %v1019, 2
      %v1026 = vrot.slane %v1020, 2
      %v1027 = vsel %vm223, %v1025, %v1026
      %v1028 = vrot.slane %v1021, 2
      %v1029 = vsel %vm223, %v1026, %v1028
      %v1032 = vadd.f32 %v1015, %v1027
      %v1033 = vadd.f32 %v1016, %v1029
      %s1034 = sld [smem:[#allocation4 + $0x34]]
      %v1035 = vstv %s1034
      %v1036 = vmul.f32 %v1035, %v991
      %v1037 = vmul.f32 %v1035, %v992
      %v1038 = vmul.f32 %v1035, %v993
      %v1042 = vrot.slane %v1036, 3
      %v1043 = vrot.slane %v1037, 3
      %v1044 = vsel %vm241, %v1042, %v1043
      %v1045 = vrot.slane %v1038, 3
      %v1046 = vsel %vm241, %v1043, %v1045
      %v1049 = vadd.f32 %v1032, %v1044
      %v1050 = vadd.f32 %v1033, %v1046
      %s1051 = sld [smem:[#allocation4 + $0x35]]
      %v1052 = vstv %s1051
      %v1053 = vmul.f32 %v1052, %v991
      %v1054 = vmul.f32 %v1052, %v992
      %v1055 = vmul.f32 %v1052, %v993
      %v1059 = vrot.slane %v1053, 4
      %v1060 = vrot.slane %v1054, 4
      %v1061 = vsel %vm259, %v1059, %v1060
      %v1062 = vrot.slane %v1055, 4
      %v1063 = vsel %vm259, %v1060, %v1062
      %v1066 = vadd.f32 %v1049, %v1061
      %v1067 = vadd.f32 %v1050, %v1063
      %s1068 = sld [smem:[#allocation4 + $0x36]]
      %v1069 = vstv %s1068
      %v1070 = vmul.f32 %v1069, %v991
      %v1071 = vmul.f32 %v1069, %v992
      %v1072 = vmul.f32 %v1069, %v993
      %v1076 = vrot.slane %v1070, 5
      %v1077 = vrot.slane %v1071, 5
      %v1078 = vsel %vm277, %v1076, %v1077
      %v1079 = vrot.slane %v1072, 5
      %v1080 = vsel %vm277, %v1077, %v1079
      %v1083 = vadd.f32 %v1066, %v1078
      %v1084 = vadd.f32 %v1067, %v1080
      %s1085 = sld [smem:[#allocation4 + $0x37]]
      %v1086 = vstv %s1085
      %v1087 = vmul.f32 %v1086, %v991
      %v1088 = vmul.f32 %v1086, %v992
      %v1089 = vmul.f32 %v1086, %v993
      %v1093 = vrot.slane %v1087, 6
      %v1094 = vrot.slane %v1088, 6
      %v1095 = vsel %vm295, %v1093, %v1094
      %v1096 = vrot.slane %v1089, 6
      %v1097 = vsel %vm295, %v1094, %v1096
      %v1100 = vadd.f32 %v1083, %v1095
      %v1101 = vadd.f32 %v1084, %v1097
      %s1102 = sadd.s32 %s306, 528
      %s1103 = scalar_lea.vmem [#allocation2], %s1102
      %v1104 = vld [vmem:[%s1103] sm:$0xff]
      %v1105 = vld [vmem:[%s1103 + $0x8] sm:$0xff]
      %v1106 = vld [vmem:[%s1103 + $0x10] sm:$0x3f]
      %s1107 = sld [smem:[#allocation4 + $0x38]]
      %v1108 = vstv %s1107
      %v1109 = vmul.f32 %v1108, %v1104
      %v1110 = vmul.f32 %v1108, %v1105
      %v1111 = vadd.f32 %v1100, %v1109
      %v1112 = vadd.f32 %v1101, %v1110
      %s1113 = sld [smem:[#allocation4 + $0x39]]
      %v1114 = vstv %s1113
      %v1115 = vmul.f32 %v1114, %v1104
      %v1116 = vmul.f32 %v1114, %v1105
      %v1117 = vmul.f32 %v1114, %v1106
      %v1121 = vrot.slane %v1115, 1
      %v1122 = vrot.slane %v1116, 1
      %v1123 = vsel %vm205, %v1121, %v1122
      %v1124 = vrot.slane %v1117, 1
      %v1125 = vsel %vm205, %v1122, %v1124
      %v1128 = vadd.f32 %v1111, %v1123
      %v1129 = vadd.f32 %v1112, %v1125
      %s1130 = sld [smem:[#allocation4 + $0x3a]]
      %v1131 = vstv %s1130
      %v1132 = vmul.f32 %v1131, %v1104
      %v1133 = vmul.f32 %v1131, %v1105
      %v1134 = vmul.f32 %v1131, %v1106
      %v1138 = vrot.slane %v1132, 2
      %v1139 = vrot.slane %v1133, 2
      %v1140 = vsel %vm223, %v1138, %v1139
      %v1141 = vrot.slane %v1134, 2
      %v1142 = vsel %vm223, %v1139, %v1141
      %v1145 = vadd.f32 %v1128, %v1140
      %v1146 = vadd.f32 %v1129, %v1142
      %s1147 = sld [smem:[#allocation4 + $0x3b]]
      %v1148 = vstv %s1147
      %v1149 = vmul.f32 %v1148, %v1104
      %v1150 = vmul.f32 %v1148, %v1105
      %v1151 = vmul.f32 %v1148, %v1106
      %v1155 = vrot.slane %v1149, 3
      %v1156 = vrot.slane %v1150, 3
      %v1157 = vsel %vm241, %v1155, %v1156
      %v1158 = vrot.slane %v1151, 3
      %v1159 = vsel %vm241, %v1156, %v1158
      %v1162 = vadd.f32 %v1145, %v1157
      %v1163 = vadd.f32 %v1146, %v1159
      %s1164 = sld [smem:[#allocation4 + $0x3c]]
      %v1165 = vstv %s1164
      %v1166 = vmul.f32 %v1165, %v1104
      %v1167 = vmul.f32 %v1165, %v1105
      %v1168 = vmul.f32 %v1165, %v1106
      %v1172 = vrot.slane %v1166, 4
      %v1173 = vrot.slane %v1167, 4
      %v1174 = vsel %vm259, %v1172, %v1173
      %v1175 = vrot.slane %v1168, 4
      %v1176 = vsel %vm259, %v1173, %v1175
      %v1179 = vadd.f32 %v1162, %v1174
      %v1180 = vadd.f32 %v1163, %v1176
      %s1181 = sld [smem:[#allocation4 + $0x3d]]
      %v1182 = vstv %s1181
      %v1183 = vmul.f32 %v1182, %v1104
      %v1184 = vmul.f32 %v1182, %v1105
      %v1185 = vmul.f32 %v1182, %v1106
      %v1189 = vrot.slane %v1183, 5
      %v1190 = vrot.slane %v1184, 5
      %v1191 = vsel %vm277, %v1189, %v1190
      %v1192 = vrot.slane %v1185, 5
      %v1193 = vsel %vm277, %v1190, %v1192
      %v1196 = vadd.f32 %v1179, %v1191
      %v1197 = vadd.f32 %v1180, %v1193
      %s1198 = sld [smem:[#allocation4 + $0x3e]]
      %v1199 = vstv %s1198
      %v1200 = vmul.f32 %v1199, %v1104
      %v1201 = vmul.f32 %v1199, %v1105
      %v1202 = vmul.f32 %v1199, %v1106
      %v1206 = vrot.slane %v1200, 6
      %v1207 = vrot.slane %v1201, 6
      %v1208 = vsel %vm295, %v1206, %v1207
      %v1209 = vrot.slane %v1202, 6
      %v1210 = vsel %vm295, %v1207, %v1209
      %v1213 = vadd.f32 %v1196, %v1208
      %v1214 = vadd.f32 %v1197, %v1210
      %s1215 = sadd.s32 %s420, 528
      %s1216 = scalar_lea.vmem [#allocation2], %s1215
      %v1217 = vld [vmem:[%s1216] sm:$0xff]
      %v1218 = vld [vmem:[%s1216 + $0x8] sm:$0xff]
      %v1219 = vld [vmem:[%s1216 + $0x10] sm:$0x3f]
      %s1220 = sld [smem:[#allocation4 + $0x3f]]
      %v1221 = vstv %s1220
      %v1222 = vmul.f32 %v1221, %v1217
      %v1223 = vmul.f32 %v1221, %v1218
      %v1224 = vadd.f32 %v1213, %v1222
      %v1225 = vadd.f32 %v1214, %v1223
      %s1226 = sld [smem:[#allocation4 + $0x40]]
      %v1227 = vstv %s1226
      %v1228 = vmul.f32 %v1227, %v1217
      %v1229 = vmul.f32 %v1227, %v1218
      %v1230 = vmul.f32 %v1227, %v1219
      %v1234 = vrot.slane %v1228, 1
      %v1235 = vrot.slane %v1229, 1
      %v1236 = vsel %vm205, %v1234, %v1235
      %v1237 = vrot.slane %v1230, 1
      %v1238 = vsel %vm205, %v1235, %v1237
      %v1241 = vadd.f32 %v1224, %v1236
      %v1242 = vadd.f32 %v1225, %v1238
      %s1243 = sld [smem:[#allocation4 + $0x41]]
      %v1244 = vstv %s1243
      %v1245 = vmul.f32 %v1244, %v1217
      %v1246 = vmul.f32 %v1244, %v1218
      %v1247 = vmul.f32 %v1244, %v1219
      %v1251 = vrot.slane %v1245, 2
      %v1252 = vrot.slane %v1246, 2
      %v1253 = vsel %vm223, %v1251, %v1252
      %v1254 = vrot.slane %v1247, 2
      %v1255 = vsel %vm223, %v1252, %v1254
      %v1258 = vadd.f32 %v1241, %v1253
      %v1259 = vadd.f32 %v1242, %v1255
      %s1260 = sld [smem:[#allocation4 + $0x42]]
      %v1261 = vstv %s1260
      %v1262 = vmul.f32 %v1261, %v1217
      %v1263 = vmul.f32 %v1261, %v1218
      %v1264 = vmul.f32 %v1261, %v1219
      %v1268 = vrot.slane %v1262, 3
      %v1269 = vrot.slane %v1263, 3
      %v1270 = vsel %vm241, %v1268, %v1269
      %v1271 = vrot.slane %v1264, 3
      %v1272 = vsel %vm241, %v1269, %v1271
      %v1275 = vadd.f32 %v1258, %v1270
      %v1276 = vadd.f32 %v1259, %v1272
      %s1277 = sld [smem:[#allocation4 + $0x43]]
      %v1278 = vstv %s1277
      %v1279 = vmul.f32 %v1278, %v1217
      %v1280 = vmul.f32 %v1278, %v1218
      %v1281 = vmul.f32 %v1278, %v1219
      %v1285 = vrot.slane %v1279, 4
      %v1286 = vrot.slane %v1280, 4
      %v1287 = vsel %vm259, %v1285, %v1286
      %v1288 = vrot.slane %v1281, 4
      %v1289 = vsel %vm259, %v1286, %v1288
      %v1292 = vadd.f32 %v1275, %v1287
      %v1293 = vadd.f32 %v1276, %v1289
      %s1294 = sld [smem:[#allocation4 + $0x44]]
      %v1295 = vstv %s1294
      %v1296 = vmul.f32 %v1295, %v1217
      %v1297 = vmul.f32 %v1295, %v1218
      %v1298 = vmul.f32 %v1295, %v1219
      %v1302 = vrot.slane %v1296, 5
      %v1303 = vrot.slane %v1297, 5
      %v1304 = vsel %vm277, %v1302, %v1303
      %v1305 = vrot.slane %v1298, 5
      %v1306 = vsel %vm277, %v1303, %v1305
      %v1309 = vadd.f32 %v1292, %v1304
      %v1310 = vadd.f32 %v1293, %v1306
      %s1311 = sld [smem:[#allocation4 + $0x45]]
      %v1312 = vstv %s1311
      %v1313 = vmul.f32 %v1312, %v1217
      %v1314 = vmul.f32 %v1312, %v1218
      %v1315 = vmul.f32 %v1312, %v1219
      %v1319 = vrot.slane %v1313, 6
      %v1320 = vrot.slane %v1314, 6
      %v1321 = vsel %vm295, %v1319, %v1320
      %v1322 = vrot.slane %v1315, 6
      %v1323 = vsel %vm295, %v1320, %v1322
      %v1326 = vadd.f32 %v1309, %v1321
      %v1327 = vadd.f32 %v1310, %v1323
      %s1328 = sadd.s32 %s534, 528
      %s1329 = scalar_lea.vmem [#allocation2], %s1328
      %v1330 = vld [vmem:[%s1329] sm:$0xff]
      %v1331 = vld [vmem:[%s1329 + $0x8] sm:$0xff]
      %v1332 = vld [vmem:[%s1329 + $0x10] sm:$0x3f]
      %s1333 = sld [smem:[#allocation4 + $0x46]]
      %v1334 = vstv %s1333
      %v1335 = vmul.f32 %v1334, %v1330
      %v1336 = vmul.f32 %v1334, %v1331
      %v1337 = vadd.f32 %v1326, %v1335
      %v1338 = vadd.f32 %v1327, %v1336
      %s1339 = sld [smem:[#allocation4 + $0x47]]
      %v1340 = vstv %s1339
      %v1341 = vmul.f32 %v1340, %v1330
      %v1342 = vmul.f32 %v1340, %v1331
      %v1343 = vmul.f32 %v1340, %v1332
      %v1347 = vrot.slane %v1341, 1
      %v1348 = vrot.slane %v1342, 1
      %v1349 = vsel %vm205, %v1347, %v1348
      %v1350 = vrot.slane %v1343, 1
      %v1351 = vsel %vm205, %v1348, %v1350
      %v1354 = vadd.f32 %v1337, %v1349
      %v1355 = vadd.f32 %v1338, %v1351
      %s1356 = sld [smem:[#allocation4 + $0x48]]
      %v1357 = vstv %s1356
      %v1358 = vmul.f32 %v1357, %v1330
      %v1359 = vmul.f32 %v1357, %v1331
      %v1360 = vmul.f32 %v1357, %v1332
      %v1364 = vrot.slane %v1358, 2
      %v1365 = vrot.slane %v1359, 2
      %v1366 = vsel %vm223, %v1364, %v1365
      %v1367 = vrot.slane %v1360, 2
      %v1368 = vsel %vm223, %v1365, %v1367
      %v1371 = vadd.f32 %v1354, %v1366
      %v1372 = vadd.f32 %v1355, %v1368
      %s1373 = sld [smem:[#allocation4 + $0x49]]
      %v1374 = vstv %s1373
      %v1375 = vmul.f32 %v1374, %v1330
      %v1376 = vmul.f32 %v1374, %v1331
      %v1377 = vmul.f32 %v1374, %v1332
      %v1381 = vrot.slane %v1375, 3
      %v1382 = vrot.slane %v1376, 3
      %v1383 = vsel %vm241, %v1381, %v1382
      %v1384 = vrot.slane %v1377, 3
      %v1385 = vsel %vm241, %v1382, %v1384
      %v1388 = vadd.f32 %v1371, %v1383
      %v1389 = vadd.f32 %v1372, %v1385
      %s1390 = sld [smem:[#allocation4 + $0x4a]]
      %v1391 = vstv %s1390
      %v1392 = vmul.f32 %v1391, %v1330
      %v1393 = vmul.f32 %v1391, %v1331
      %v1394 = vmul.f32 %v1391, %v1332
      %v1398 = vrot.slane %v1392, 4
      %v1399 = vrot.slane %v1393, 4
      %v1400 = vsel %vm259, %v1398, %v1399
      %v1401 = vrot.slane %v1394, 4
      %v1402 = vsel %vm259, %v1399, %v1401
      %v1405 = vadd.f32 %v1388, %v1400
      %v1406 = vadd.f32 %v1389, %v1402
      %s1407 = sld [smem:[#allocation4 + $0x4b]]
      %v1408 = vstv %s1407
      %v1409 = vmul.f32 %v1408, %v1330
      %v1410 = vmul.f32 %v1408, %v1331
      %v1411 = vmul.f32 %v1408, %v1332
      %v1415 = vrot.slane %v1409, 5
      %v1416 = vrot.slane %v1410, 5
      %v1417 = vsel %vm277, %v1415, %v1416
      %v1418 = vrot.slane %v1411, 5
      %v1419 = vsel %vm277, %v1416, %v1418
      %v1422 = vadd.f32 %v1405, %v1417
      %v1423 = vadd.f32 %v1406, %v1419
      %s1424 = sld [smem:[#allocation4 + $0x4c]]
      %v1425 = vstv %s1424
      %v1426 = vmul.f32 %v1425, %v1330
      %v1427 = vmul.f32 %v1425, %v1331
      %v1428 = vmul.f32 %v1425, %v1332
      %v1432 = vrot.slane %v1426, 6
      %v1433 = vrot.slane %v1427, 6
      %v1434 = vsel %vm295, %v1432, %v1433
      %v1435 = vrot.slane %v1428, 6
      %v1436 = vsel %vm295, %v1433, %v1435
      %v1439 = vadd.f32 %v1422, %v1434
      %v1440 = vadd.f32 %v1423, %v1436
      %s1441 = sadd.s32 %s648, 528
      %s1442 = scalar_lea.vmem [#allocation2], %s1441
      %v1443 = vld [vmem:[%s1442] sm:$0xff]
      %v1444 = vld [vmem:[%s1442 + $0x8] sm:$0xff]
      %v1445 = vld [vmem:[%s1442 + $0x10] sm:$0x3f]
      %s1446 = sld [smem:[#allocation4 + $0x4d]]
      %v1447 = vstv %s1446
      %v1448 = vmul.f32 %v1447, %v1443
      %v1449 = vmul.f32 %v1447, %v1444
      %v1450 = vadd.f32 %v1439, %v1448
      %v1451 = vadd.f32 %v1440, %v1449
      %s1452 = sld [smem:[#allocation4 + $0x4e]]
      %v1453 = vstv %s1452
      %v1454 = vmul.f32 %v1453, %v1443
      %v1455 = vmul.f32 %v1453, %v1444
      %v1456 = vmul.f32 %v1453, %v1445
      %v1460 = vrot.slane %v1454, 1
      %v1461 = vrot.slane %v1455, 1
      %v1462 = vsel %vm205, %v1460, %v1461
      %v1463 = vrot.slane %v1456, 1
      %v1464 = vsel %vm205, %v1461, %v1463
      %v1467 = vadd.f32 %v1450, %v1462
      %v1468 = vadd.f32 %v1451, %v1464
      %s1469 = sld [smem:[#allocation4 + $0x4f]]
      %v1470 = vstv %s1469
      %v1471 = vmul.f32 %v1470, %v1443
      %v1472 = vmul.f32 %v1470, %v1444
      %v1473 = vmul.f32 %v1470, %v1445
      %v1477 = vrot.slane %v1471, 2
      %v1478 = vrot.slane %v1472, 2
      %v1479 = vsel %vm223, %v1477, %v1478
      %v1480 = vrot.slane %v1473, 2
      %v1481 = vsel %vm223, %v1478, %v1480
      %v1484 = vadd.f32 %v1467, %v1479
      %v1485 = vadd.f32 %v1468, %v1481
      %s1486 = sld [smem:[#allocation4 + $0x50]]
      %v1487 = vstv %s1486
      %v1488 = vmul.f32 %v1487, %v1443
      %v1489 = vmul.f32 %v1487, %v1444
      %v1490 = vmul.f32 %v1487, %v1445
      %v1494 = vrot.slane %v1488, 3
      %v1495 = vrot.slane %v1489, 3
      %v1496 = vsel %vm241, %v1494, %v1495
      %v1497 = vrot.slane %v1490, 3
      %v1498 = vsel %vm241, %v1495, %v1497
      %v1501 = vadd.f32 %v1484, %v1496
      %v1502 = vadd.f32 %v1485, %v1498
      %s1503 = sld [smem:[#allocation4 + $0x51]]
      %v1504 = vstv %s1503
      %v1505 = vmul.f32 %v1504, %v1443
      %v1506 = vmul.f32 %v1504, %v1444
      %v1507 = vmul.f32 %v1504, %v1445
      %v1511 = vrot.slane %v1505, 4
      %v1512 = vrot.slane %v1506, 4
      %v1513 = vsel %vm259, %v1511, %v1512
      %v1514 = vrot.slane %v1507, 4
      %v1515 = vsel %vm259, %v1512, %v1514
      %v1518 = vadd.f32 %v1501, %v1513
      %v1519 = vadd.f32 %v1502, %v1515
      %s1520 = sld [smem:[#allocation4 + $0x52]]
      %v1521 = vstv %s1520
      %v1522 = vmul.f32 %v1521, %v1443
      %v1523 = vmul.f32 %v1521, %v1444
      %v1524 = vmul.f32 %v1521, %v1445
      %v1528 = vrot.slane %v1522, 5
      %v1529 = vrot.slane %v1523, 5
      %v1530 = vsel %vm277, %v1528, %v1529
      %v1531 = vrot.slane %v1524, 5
      %v1532 = vsel %vm277, %v1529, %v1531
      %v1535 = vadd.f32 %v1518, %v1530
      %v1536 = vadd.f32 %v1519, %v1532
      %s1537 = sld [smem:[#allocation4 + $0x53]]
      %v1538 = vstv %s1537
      %v1539 = vmul.f32 %v1538, %v1443
      %v1540 = vmul.f32 %v1538, %v1444
      %v1541 = vmul.f32 %v1538, %v1445
      %v1545 = vrot.slane %v1539, 6
      %v1546 = vrot.slane %v1540, 6
      %v1547 = vsel %vm295, %v1545, %v1546
      %v1548 = vrot.slane %v1541, 6
      %v1549 = vsel %vm295, %v1546, %v1548
      %v1552 = vadd.f32 %v1535, %v1547
      %v1553 = vadd.f32 %v1536, %v1549
      %s1554 = sadd.s32 %s762, 528
      %s1555 = scalar_lea.vmem [#allocation2], %s1554
      %v1556 = vld [vmem:[%s1555] sm:$0xff]
      %v1557 = vld [vmem:[%s1555 + $0x8] sm:$0xff]
      %v1558 = vld [vmem:[%s1555 + $0x10] sm:$0x3f]
      %s1559 = sld [smem:[#allocation4 + $0x54]]
      %v1560 = vstv %s1559
      %v1561 = vmul.f32 %v1560, %v1556
      %v1562 = vmul.f32 %v1560, %v1557
      %v1563 = vadd.f32 %v1552, %v1561
      %v1564 = vadd.f32 %v1553, %v1562
      %s1565 = sld [smem:[#allocation4 + $0x55]]
      %v1566 = vstv %s1565
      %v1567 = vmul.f32 %v1566, %v1556
      %v1568 = vmul.f32 %v1566, %v1557
      %v1569 = vmul.f32 %v1566, %v1558
      %v1573 = vrot.slane %v1567, 1
      %v1574 = vrot.slane %v1568, 1
      %v1575 = vsel %vm205, %v1573, %v1574
      %v1576 = vrot.slane %v1569, 1
      %v1577 = vsel %vm205, %v1574, %v1576
      %v1580 = vadd.f32 %v1563, %v1575
      %v1581 = vadd.f32 %v1564, %v1577
      %s1582 = sld [smem:[#allocation4 + $0x56]]
      %v1583 = vstv %s1582
      %v1584 = vmul.f32 %v1583, %v1556
      %v1585 = vmul.f32 %v1583, %v1557
      %v1586 = vmul.f32 %v1583, %v1558
      %v1590 = vrot.slane %v1584, 2
      %v1591 = vrot.slane %v1585, 2
      %v1592 = vsel %vm223, %v1590, %v1591
      %v1593 = vrot.slane %v1586, 2
      %v1594 = vsel %vm223, %v1591, %v1593
      %v1597 = vadd.f32 %v1580, %v1592
      %v1598 = vadd.f32 %v1581, %v1594
      %s1599 = sld [smem:[#allocation4 + $0x57]]
      %v1600 = vstv %s1599
      %v1601 = vmul.f32 %v1600, %v1556
      %v1602 = vmul.f32 %v1600, %v1557
      %v1603 = vmul.f32 %v1600, %v1558
      %v1607 = vrot.slane %v1601, 3
      %v1608 = vrot.slane %v1602, 3
      %v1609 = vsel %vm241, %v1607, %v1608
      %v1610 = vrot.slane %v1603, 3
      %v1611 = vsel %vm241, %v1608, %v1610
      %v1614 = vadd.f32 %v1597, %v1609
      %v1615 = vadd.f32 %v1598, %v1611
      %s1616 = sld [smem:[#allocation4 + $0x58]]
      %v1617 = vstv %s1616
      %v1618 = vmul.f32 %v1617, %v1556
      %v1619 = vmul.f32 %v1617, %v1557
      %v1620 = vmul.f32 %v1617, %v1558
      %v1624 = vrot.slane %v1618, 4
      %v1625 = vrot.slane %v1619, 4
      %v1626 = vsel %vm259, %v1624, %v1625
      %v1627 = vrot.slane %v1620, 4
      %v1628 = vsel %vm259, %v1625, %v1627
      %v1631 = vadd.f32 %v1614, %v1626
      %v1632 = vadd.f32 %v1615, %v1628
      %s1633 = sld [smem:[#allocation4 + $0x59]]
      %v1634 = vstv %s1633
      %v1635 = vmul.f32 %v1634, %v1556
      %v1636 = vmul.f32 %v1634, %v1557
      %v1637 = vmul.f32 %v1634, %v1558
      %v1641 = vrot.slane %v1635, 5
      %v1642 = vrot.slane %v1636, 5
      %v1643 = vsel %vm277, %v1641, %v1642
      %v1644 = vrot.slane %v1637, 5
      %v1645 = vsel %vm277, %v1642, %v1644
      %v1648 = vadd.f32 %v1631, %v1643
      %v1649 = vadd.f32 %v1632, %v1645
      %s1650 = sld [smem:[#allocation4 + $0x5a]]
      %v1651 = vstv %s1650
      %v1652 = vmul.f32 %v1651, %v1556
      %v1653 = vmul.f32 %v1651, %v1557
      %v1654 = vmul.f32 %v1651, %v1558
      %v1658 = vrot.slane %v1652, 6
      %v1659 = vrot.slane %v1653, 6
      %v1660 = vsel %vm295, %v1658, %v1659
      %v1661 = vrot.slane %v1654, 6
      %v1662 = vsel %vm295, %v1659, %v1661
      %v1665 = vadd.f32 %v1648, %v1660
      %v1666 = vadd.f32 %v1649, %v1662
      %s1667 = sadd.s32 %s876, 528
      %s1668 = scalar_lea.vmem [#allocation2], %s1667
      %v1669 = vld [vmem:[%s1668] sm:$0xff]
      %v1670 = vld [vmem:[%s1668 + $0x8] sm:$0xff]
      %v1671 = vld [vmem:[%s1668 + $0x10] sm:$0x3f]
      %s1672 = sld [smem:[#allocation4 + $0x5b]]
      %v1673 = vstv %s1672
      %v1674 = vmul.f32 %v1673, %v1669
      %v1675 = vmul.f32 %v1673, %v1670
      %v1676 = vadd.f32 %v1665, %v1674
      %v1677 = vadd.f32 %v1666, %v1675
      %s1678 = sld [smem:[#allocation4 + $0x5c]]
      %v1679 = vstv %s1678
      %v1680 = vmul.f32 %v1679, %v1669
      %v1681 = vmul.f32 %v1679, %v1670
      %v1682 = vmul.f32 %v1679, %v1671
      %v1686 = vrot.slane %v1680, 1
      %v1687 = vrot.slane %v1681, 1
      %v1688 = vsel %vm205, %v1686, %v1687
      %v1689 = vrot.slane %v1682, 1
      %v1690 = vsel %vm205, %v1687, %v1689
      %v1693 = vadd.f32 %v1676, %v1688
      %v1694 = vadd.f32 %v1677, %v1690
      %s1695 = sld [smem:[#allocation4 + $0x5d]]
      %v1696 = vstv %s1695
      %v1697 = vmul.f32 %v1696, %v1669
      %v1698 = vmul.f32 %v1696, %v1670
      %v1699 = vmul.f32 %v1696, %v1671
      %v1703 = vrot.slane %v1697, 2
      %v1704 = vrot.slane %v1698, 2
      %v1705 = vsel %vm223, %v1703, %v1704
      %v1706 = vrot.slane %v1699, 2
      %v1707 = vsel %vm223, %v1704, %v1706
      %v1710 = vadd.f32 %v1693, %v1705
      %v1711 = vadd.f32 %v1694, %v1707
      %s1712 = sld [smem:[#allocation4 + $0x5e]]
      %v1713 = vstv %s1712
      %v1714 = vmul.f32 %v1713, %v1669
      %v1715 = vmul.f32 %v1713, %v1670
      %v1716 = vmul.f32 %v1713, %v1671
      %v1720 = vrot.slane %v1714, 3
      %v1721 = vrot.slane %v1715, 3
      %v1722 = vsel %vm241, %v1720, %v1721
      %v1723 = vrot.slane %v1716, 3
      %v1724 = vsel %vm241, %v1721, %v1723
      %v1727 = vadd.f32 %v1710, %v1722
      %v1728 = vadd.f32 %v1711, %v1724
      %s1729 = sld [smem:[#allocation4 + $0x5f]]
      %v1730 = vstv %s1729
      %v1731 = vmul.f32 %v1730, %v1669
      %v1732 = vmul.f32 %v1730, %v1670
      %v1733 = vmul.f32 %v1730, %v1671
      %v1737 = vrot.slane %v1731, 4
      %v1738 = vrot.slane %v1732, 4
      %v1739 = vsel %vm259, %v1737, %v1738
      %v1740 = vrot.slane %v1733, 4
      %v1741 = vsel %vm259, %v1738, %v1740
      %v1744 = vadd.f32 %v1727, %v1739
      %v1745 = vadd.f32 %v1728, %v1741
      %s1746 = sld [smem:[#allocation4 + $0x60]]
      %v1747 = vstv %s1746
      %v1748 = vmul.f32 %v1747, %v1669
      %v1749 = vmul.f32 %v1747, %v1670
      %v1750 = vmul.f32 %v1747, %v1671
      %v1754 = vrot.slane %v1748, 5
      %v1755 = vrot.slane %v1749, 5
      %v1756 = vsel %vm277, %v1754, %v1755
      %v1757 = vrot.slane %v1750, 5
      %v1758 = vsel %vm277, %v1755, %v1757
      %v1761 = vadd.f32 %v1744, %v1756
      %v1762 = vadd.f32 %v1745, %v1758
      %s1763 = sld [smem:[#allocation4 + $0x61]]
      %v1764 = vstv %s1763
      %v1765 = vmul.f32 %v1764, %v1669
      %v1766 = vmul.f32 %v1764, %v1670
      %v1767 = vmul.f32 %v1764, %v1671
      %v1771 = vrot.slane %v1765, 6
      %v1772 = vrot.slane %v1766, 6
      %v1773 = vsel %vm295, %v1771, %v1772
      %v1774 = vrot.slane %v1767, 6
      %v1775 = vsel %vm295, %v1772, %v1774
      %v1778 = vadd.f32 %v1761, %v1773
      %v1779 = vadd.f32 %v1762, %v1775
      %v1780 = vxor.u32 %v1778, 2147483648
      %v1781 = vxor.u32 %v1779, 2147483648
      %v1782 = vmul.f32 %v1780, 1.442695
      %v1783 = vpow.pop %v1782
      %v1784 = vmul.f32 %v1781, 1.442695
      %v1785 = vpow.pop %v1784
      %v1786 = vadd.f32 %v1783, 1.0
      %v1787 = vadd.f32 %v1785, 1.0
      %v1788 = vrcp.pop %v1786
      %v1789 = vmul.f32 1.0, %v1788
      %v1790 = vrcp.pop %v1787
      %v1791 = vmul.f32 1.0, %v1790
      %s1792 = smul.u32 %s181, 16
      %s1793 = scalar_lea.vmem %s2, %s1792
      %v1794 = vld [vmem:[%s1793] sm:$0xff]
      %v1795 = vld [vmem:[%s1793 + $0x8] sm:$0xff]
      %v1796 = vmul.f32 %v1794, %v1789
      %v1797 = vmul.f32 %v1795, %v1791
      %s1798 = scalar_lea.vmem %s3, %s1792
      %1799 = vst.msk [vmem:[%s1798] sm:$0xff] %vm28, %v1796
      %1800 = vst.msk [vmem:[%s1798 + $0x8] sm:$0xff] %vm28, %v1797
      %s1801 = sadd.s32 %s1792, 256
      %s1802 = scalar_lea.vmem %s2, %s1801
      %v1803 = vld [vmem:[%s1802] sm:$0xff]
      %v1804 = vld [vmem:[%s1802 + $0x8] sm:$0xff]
      %v1805 = vmul.f32 %v1803, %v1789
      %v1806 = vmul.f32 %v1804, %v1791
      %s1807 = scalar_lea.vmem %s3, %s1801
      %1808 = vst.msk [vmem:[%s1807] sm:$0xff] %vm28, %v1805
      %1809 = vst.msk [vmem:[%s1807 + $0x8] sm:$0xff] %vm28, %v1806
      %s1810 = sadd.s32 %s1792, 512
      %s1811 = scalar_lea.vmem %s2, %s1810
      %v1812 = vld [vmem:[%s1811] sm:$0xff]
      %v1813 = vld [vmem:[%s1811 + $0x8] sm:$0xff]
      %v1814 = vmul.f32 %v1812, %v1789
      %v1815 = vmul.f32 %v1813, %v1791
      %s1816 = scalar_lea.vmem %s3, %s1810
      %1817 = vst.msk [vmem:[%s1816] sm:$0xff] %vm28, %v1814
      %1818 = vst.msk [vmem:[%s1816 + $0x8] sm:$0xff] %vm28, %v1815
      %s1819 = sadd.s32 %s1792, 768
      %s1820 = scalar_lea.vmem %s2, %s1819
      %v1821 = vld [vmem:[%s1820] sm:$0xff]
      %v1822 = vld [vmem:[%s1820 + $0x8] sm:$0xff]
      %v1823 = vmul.f32 %v1821, %v1789
      %v1824 = vmul.f32 %v1822, %v1791
      %s1825 = scalar_lea.vmem %s3, %s1819
      %1826 = vst.msk [vmem:[%s1825] sm:$0xff] %vm28, %v1823
      %1827 = vst.msk [vmem:[%s1825 + $0x8] sm:$0xff] %vm28, %v1824
    $region29: #{spatial_attention.1} parent=1 // loop_footer
      %s185 = sadd.s32 1, %s181
    $region30: #{spatial_attention.1} parent=1 // loop_footer_branch
      %180 = sbr.rel target = $region26
    $region31: #{spatial_attention.1} parent=1 // loop_exit
      _
    // Predicated region
    $region32: #{spatial_attention.1} parent=1 // pred_check
      _
    $region33: #{spatial_attention.1} parent=1 // pred_check_branch
      %1829 = sbr.rel (0) target = $region35
    $region34: #{spatial_attention.1} parent=1 // pred_region
      _
    $region35: #{spatial_attention.1} parent=1 // pred_fallthru
      _
    // Predicated region
    $region36: #{spatial_attention.1} parent=1 // pred_check
      _
    $region37: #{spatial_attention.1} parent=1 // pred_check_branch
      %1831 = sbr.rel (0) target = $region39
    $region38: #{spatial_attention.1} parent=1 // pred_region
      _
    $region39: #{spatial_attention.1} parent=1 // pred_fallthru
      _
    %1832 = vsyncpa [#allocation5], 1

</llo_original>
